<compile_context>
chip_gen: v6e
topology: v6e:2x2x1
jax: 0.10.0
libtpu: 0.0.40
codegen_flags: <defaults>
</compile_context>

<pallas_src>
import functools

import jax
import jax.numpy as jnp
from jax.experimental import pallas as pl
from jax.experimental.pallas import tpu as pltpu

_SQRT_HALF = 0.7071067811865476


def _gelu_exact(x):
    # matches torch.nn.GELU() default (erf formulation)
    return 0.5 * x * (1.0 + jax.lax.erf(x * _SQRT_HALF))


def _round_up(v, m):
    return ((v + m - 1) // m) * m


# ----------------------------- fused MoE kernel ------------------------------

def moe_kernel(es_ref, as_ref, cnt_ref,                    # SMEM schedules
               x_ref, cw_ref,                              # (tm, mm), (tm, E) f32
               ew1_ref, eb1_ref, ew2_ref, eb2_ref,         # expert weights
               aw1_ref, ab1_ref, aw2_ref, ab2_ref,         # adapter weights
               p1w1_ref, p1b1_ref, p1w2_ref, p1b2_ref,     # proj1 weights
               res_ref, x2_ref, x1_ref,                    # outputs (J, tm, tn)
               hp_ref, he_ref, ha_ref, acc_ref,            # VMEM scratch
               *, n_experts, resident):
    i = pl.program_id(0)        # token tile
    s = pl.program_id(1)        # expert slot (compacted schedule)
    j = pl.program_id(2)        # output-column tile
    n_slots = pl.num_programs(1)

    e_id = es_ref[i * n_experts + s]          # expert id scheduled at this slot
    active = s < cnt_ref[i]                   # slot actually routed for this tile

    if resident:                              # all weights resident -> dynamic index
        e_w = e_id
        a_w = jnp.maximum(e_id - 1, 0)
    else:                                     # one streamed slab per slot
        e_w = 0
        a_w = 0

    def first(xv, w, b):                      # x @ W1 + b1 -> GELU (f32)
        h = jnp.dot(xv, w, preferred_element_type=jnp.float32)
        return _gelu_exact(h + b.astype(jnp.float32))

    def second(h_ref, w, b):                  # h @ W2[:, cols] + b2[cols] (f32)
        return (jnp.dot(h_ref[...], w, preferred_element_type=jnp.float32)
                + b.astype(jnp.float32))

    # ---- first layer hiddens: once per (tile, slot), at j == 0 --------------
    @pl.when(jnp.logical_and(j == 0, s == 0))
    def _slot0_hidden():
        acc_ref[...] = jnp.zeros_like(acc_ref)
        x = x_ref[...]
        hp_ref[...] = first(x, p1w1_ref[...], p1b1_ref[...]).astype(hp_ref.dtype)
        he_ref[...] = first(x, ew1_ref[e_w], eb1_ref[e_w]).astype(he_ref.dtype)

    @pl.when(jnp.logical_and(j == 0, jnp.logical_and(s > 0, active)))
    def _slot_hidden():
        x = x_ref[...]
        he_ref[...] = first(x, ew1_ref[e_w], eb1_ref[e_w]).astype(he_ref.dtype)
        ha_ref[...] = first(x, aw1_ref[a_w], ab1_ref[a_w]).astype(ha_ref.dtype)

    # ---- per-token combine weight for the scheduled expert ------------------
    lanes = jax.lax.broadcasted_iota(jnp.int32, cw_ref.shape, 1)
    w_e = jnp.sum(jnp.where(lanes == e_id, cw_ref[...].astype(jnp.float32), 0.0),
                  axis=1, keepdims=True)                       # (tm, 1) f32

    # ---- second layer: output-column tile j ----------------------------------
    @pl.when(s == 0)
    def _slot0_second():
        oe = second(he_ref, ew2_ref[e_w], eb2_ref[e_w])        # experts[0](x) cols
        x2_ref[j] = oe.astype(x2_ref.dtype)
        acc_ref[j] = acc_ref[j] + w_e * oe
        x1_ref[j] = second(hp_ref, p1w2_ref[...],
                           p1b2_ref[...]).astype(x1_ref.dtype)  # proj1(x) cols

    @pl.when(jnp.logical_and(s > 0, active))
    def _slot_second():
        oe = second(he_ref, ew2_ref[e_w], eb2_ref[e_w])
        oa = second(ha_ref, aw2_ref[a_w], ab2_ref[a_w])
        acc_ref[j] = acc_ref[j] + w_e * (oe + oa)

    @pl.when(s == n_slots - 1)
    def _finalize():
        res_ref[j] = acc_ref[j].astype(res_ref.dtype)


# ------------------------------ planning -------------------------------------

def _vmem_capacity_bytes():
    try:
        return int(pltpu.get_tpu_info().vmem_capacity_bytes)
    except Exception:
        return 64 * 1024 * 1024          # conservative default (v7x per-TC VMEM)


def _plan(mm, ch, E, E_a, tm, itemsize, budget, force_streaming, tn_req):
    """Decide resident-vs-streamed weights and the output-column tile size."""
    s1 = (mm * ch + ch) * itemsize                   # one first-layer slab
    s2 = (ch * ch + ch) * itemsize                   # one second-layer slab
    io = 2 * (tm * mm * itemsize + tm * E * 4)       # x + f32 routing weights
    outs = 2 * 3 * tm * ch * itemsize                # res/x1/x2 resident out blocks
    hid = 3 * tm * ch * itemsize + tm * ch * 4       # hidden scratches + f32 acc

    resident_need = 2 * (E + E_a + 1) * (s1 + s2) + io + outs + hid
    if (not force_streaming) and resident_need <= budget:
        return True, ch, resident_need               # all weights resident in VMEM

    def need(tn):
        return (2 * 3 * s1                            # expert/adapter/proj1 W1 slabs
                + 2 * 3 * (ch * tn + tn) * itemsize   # column-tiled W2 slabs
                + io + outs + hid)

    if tn_req is not None:
        cands = [tn_req]
    else:
        cands = [ch] + [t for t in (2048, 1024, 512, 256, 128)
                        if t < ch and ch % t == 0]
    tn = cands[-1]
    for t in cands:
        if need(t) <= budget:
            tn = t
            break
    assert ch % tn == 0 and (tn % 128 == 0 or tn == ch), (
        "channel tile must divide `channels` and be lane-dense")
    # TODO(synk): if even tn=128 does not fit, also tile the first-layer hidden dim.
    return False, tn, need(tn)


def _cost_estimate(T_pad, num_tiles, mm, ch, E, E_a, itemsize, resident):
    mlp_flops = 2 * (mm * ch + ch * ch)
    n_mlps = 1 + E + E_a
    slab = (mm * ch + ch * ch + 2 * ch) * itemsize
    w_reads = (1 if resident else num_tiles) * (E + E_a + 1) * slab
    return pl.CostEstimate(
        flops=int(T_pad * mlp_flops * n_mlps),
        transcendentals=int(T_pad * ch * n_mlps),
        bytes_accessed=int(T_pad * mm * itemsize + T_pad * E * 4
                           + w_reads + 3 * T_pad * ch * itemsize),
    )


# ------------------------------ call wrapper ---------------------------------

def _call_moe(esched, asched, count, x_pad, cw_pad, params, *,
              tm, tn, resident, vmem_limit_bytes, cost):
    T_pad, mm = x_pad.shape
    E, _, ch = params["ew1"].shape
    E_a = params["aw1"].shape[0]
    J = ch // tn
    num_tiles = T_pad // tm
    dtype = x_pad.dtype

    def tok(i, s, j, es, asd, cnt):
        return (i, 0)

    if resident:
        w3 = lambda i, s, j, es, asd, cnt: (0, 0, 0)
        w2c = lambda i, s, j, es, asd, cnt: (0, 0)
        ew1_s = pl.BlockSpec((E, mm, ch), w3)
        eb1_s = pl.BlockSpec((E, 1, ch), w3)
        ew2_s = pl.BlockSpec((E, ch, ch), w3)
        eb2_s = pl.BlockSpec((E, 1, ch), w3)
        aw1_s = pl.BlockSpec((E_a, mm, ch), w3)
        ab1_s = pl.BlockSpec((E_a, 1, ch), w3)
        aw2_s = pl.BlockSpec((E_a, ch, ch), w3)
        ab2_s = pl.BlockSpec((E_a, 1, ch), w3)
        p1w2_s = pl.BlockSpec((ch, ch), w2c)
        p1b2_s = pl.BlockSpec((1, ch), w2c)
    else:
        # Mask-aware index maps: dead slots repeat the previous block index so
        # the auto-DMA is deduped (top-K sparsity saves HBM traffic).
        def e1(i, s, j, es, asd, cnt):
            return (es[i * E + s], 0, 0)

        def a1(i, s, j, es, asd, cnt):
            return (asd[i * E + s], 0, 0)

        def e2(i, s, j, es, asd, cnt):
            return (es[i * E + s], 0, jnp.where(s < cnt[i], j, J - 1))

        def a2(i, s, j, es, asd, cnt):
            jj = jnp.where(s < 1, 0, jnp.where(s < cnt[i], j, J - 1))
            return (asd[i * E + s], 0, jj)

        def p2(i, s, j, es, asd, cnt):
            return (0, jnp.where(s == 0, j, J - 1))

        ew1_s = pl.BlockSpec((1, mm, ch), e1)
        eb1_s = pl.BlockSpec((1, 1, ch), e1)
        ew2_s = pl.BlockSpec((1, ch, tn), e2)
        eb2_s = pl.BlockSpec((1, 1, tn), e2)
        aw1_s = pl.BlockSpec((1, mm, ch), a1)
        ab1_s = pl.BlockSpec((1, 1, ch), a1)
        aw2_s = pl.BlockSpec((1, ch, tn), a2)
        ab2_s = pl.BlockSpec((1, 1, tn), a2)
        p1w2_s = pl.BlockSpec((ch, tn), p2)
        p1b2_s = pl.BlockSpec((1, tn), p2)

    p1c = lambda i, s, j, es, asd, cnt: (0, 0)   # proj1 first layer: fetched once
    in_specs = [
        pl.BlockSpec((tm, mm), tok),             # x
        pl.BlockSpec((tm, E), tok),              # dense per-(token, expert) weights
        ew1_s, eb1_s, ew2_s, eb2_s,
        aw1_s, ab1_s, aw2_s, ab2_s,
        pl.BlockSpec((mm, ch), p1c),             # p1w1
        pl.BlockSpec((1, ch), p1c),              # p1b1
        p1w2_s, p1b2_s,
    ]

    out_map = lambda i, s, j, es, asd, cnt: (0, i, 0)   # resident per token tile
    out_specs = [pl.BlockSpec((J, tm, tn), out_map)] * 3
    out_shape = tuple(jax.ShapeDtypeStruct((J, T_pad, tn), dtype) for _ in range(3))

    kernel = functools.partial(moe_kernel, n_experts=E, resident=resident)

    return pl.pallas_call(
        kernel,
        out_shape=out_shape,
        grid_spec=pltpu.PrefetchScalarGridSpec(
            num_scalar_prefetch=3,
            grid=(num_tiles, E, J),
            in_specs=in_specs,
            out_specs=out_specs,
            scratch_shapes=[
                pltpu.VMEM((tm, ch), dtype),            # proj1 hidden
                pltpu.VMEM((tm, ch), dtype),            # expert hidden
                pltpu.VMEM((tm, ch), dtype),            # adapter hidden
                pltpu.VMEM((J, tm, tn), jnp.float32),   # f32 accumulator
            ],
        ),
        compiler_params=pltpu.CompilerParams(
            dimension_semantics=("parallel", "arbitrary", "arbitrary"),
            vmem_limit_bytes=vmem_limit_bytes,
        ),
        cost_estimate=cost,
    )(esched, asched, count, x_pad, cw_pad,
      params["ew1"], params["eb1"], params["ew2"], params["eb2"],
      params["aw1"], params["ab1"], params["aw2"], params["ab2"],
      params["p1w1"], params["p1b1"], params["p1w2"], params["p1b2"])


# ------------------------- routing / schedule (XLA) ---------------------------

def _routing_and_losses(params, x, num_selected):
    """Gate GEMM + softmax/top-k + aux losses, shared by kernel path and reference."""
    B, N, mm = x.shape
    E = params["gate_w"].shape[1]
    xf = x.reshape(-1, mm).astype(jnp.float32)
    gate_logits = jnp.dot(xf, params["gate_w"].astype(jnp.float32),
                          precision=jax.lax.Precision.HIGHEST).reshape(B, N, E)
    router_z_loss = jnp.mean(jnp.square(jax.nn.logsumexp(gate_logits, axis=-1)))

    gate_softmax = jax.nn.softmax(gate_logits, axis=-1)            # f32
    density_1_proxy = jnp.mean(gate_softmax, axis=-2)              # (B, E)
    weights, selected = jax.lax.top_k(gate_softmax, num_selected)  # (B, N, K)
    density_1 = jnp.mean(jax.nn.one_hot(selected[..., 0], E, dtype=jnp.float32),
                         axis=-2)
    balance_loss = jnp.mean(density_1_proxy * density_1) * float(E ** 2)

    weights = weights / jnp.sum(weights, axis=-1, keepdims=True)   # f32 normalize
    cw = jnp.einsum("bnk,bnke->bne", weights,
                    jax.nn.one_hot(selected, E, dtype=jnp.float32))
    return cw.reshape(B * N, E), balance_loss, router_z_loss


def _build_schedule(cw_pad, num_tiles, tm, E):
    """Per-tile compacted expert schedule (slot 0 = expert 0) + adapter look-ahead."""
    routed = (cw_pad.reshape(num_tiles, tm, E) != 0).any(axis=1)    # (tiles, E)
    if E == 1:
        z = jnp.zeros((num_tiles, 1), jnp.int32)
        return z.reshape(-1), z.reshape(-1), jnp.ones((num_tiles,), jnp.int32)

    eids = jnp.arange(1, E, dtype=jnp.int32)
    r = routed[:, 1:]
    key = jnp.where(r, eids[None, :], E)                            # non-routed -> E
    order = jnp.sort(key, axis=1)                                   # routed ids asc
    cnt1 = jnp.sum(r, axis=1).astype(jnp.int32)
    last = jnp.take_along_axis(order, jnp.maximum(cnt1 - 1, 0)[:, None], axis=1)[:, 0]
    last = jnp.where(cnt1 > 0, last, 0).astype(jnp.int32)
    erest = jnp.where(order < E, order, last[:, None]).astype(jnp.int32)
    esched = jnp.concatenate([jnp.zeros((num_tiles, 1), jnp.int32), erest], axis=1)
    arest = jnp.maximum(esched[:, 1:] - 1, 0)
    a0 = jnp.where(cnt1 > 0, esched[:, 1] - 1, 0).astype(jnp.int32)
    asched = jnp.concatenate([a0[:, None], arest], axis=1).astype(jnp.int32)
    count = (cnt1 + 1).astype(jnp.int32)
    return esched.reshape(-1), asched.reshape(-1), count


# ------------------------------ parameters ------------------------------------

def init_params(key, num_experts, mm_channels, channels, dtype=jnp.float32):
    def linear(k, fan_in, fan_out):
        kw, kb = jax.random.split(k)
        bound = 1.0 / (fan_in ** 0.5)
        w = jax.random.uniform(kw, (fan_in, fan_out), dtype, -bound, bound)
        b = jax.random.uniform(kb, (fan_out,), dtype, -bound, bound)
        return w, b

    n_keys = 3 + 2 * num_experts + 2 * max(num_experts - 1, 0)
    keys = iter(jax.random.split(key, n_keys))

    gate_w, _ = linear(next(keys), mm_channels, num_experts)       # no bias
    p1w1, p1b1 = linear(next(keys), mm_channels, channels)
    p1w2, p1b2 = linear(next(keys), channels, channels)

    ew1, eb1, ew2, eb2 = [], [], [], []
    for _ in range(num_experts):
        w1, b1 = linear(next(keys), mm_channels, channels)
        w2, b2 = linear(next(keys), channels, channels)
        ew1.append(w1); eb1.append(b1); ew2.append(w2); eb2.append(b2)

    aw1, ab1, aw2, ab2 = [], [], [], []
    for _ in range(num_experts - 1):
        w1, b1 = linear(next(keys), mm_channels, channels)
        w2, b2 = linear(next(keys), channels, channels)
        aw1.append(w1); ab1.append(b1); aw2.append(w2); ab2.append(b2)
    if not aw1:  # num_experts == 1: dummy (never used) slot to keep shapes static
        aw1 = [jnp.zeros((mm_channels, channels), dtype)]
        ab1 = [jnp.zeros((channels,), dtype)]
        aw2 = [jnp.zeros((channels, channels), dtype)]
        ab2 = [jnp.zeros((channels,), dtype)]

    return {
        "gate_w": gate_w,
        "p1w1": p1w1, "p1b1": p1b1[None, :],
        "p1w2": p1w2, "p1b2": p1b2[None, :],
        "ew1": jnp.stack(ew1), "eb1": jnp.stack(eb1)[:, None, :],
        "ew2": jnp.stack(ew2), "eb2": jnp.stack(eb2)[:, None, :],
        "aw1": jnp.stack(aw1), "ab1": jnp.stack(ab1)[:, None, :],
        "aw2": jnp.stack(aw2), "ab2": jnp.stack(ab2)[:, None, :],
    }


# ------------------------------ forward pass ----------------------------------

def mlp_moe_forward(params, x, num_selected, *, tm=256, tn=None,
                    force_streaming=False):
    B, N, mm = x.shape
    E = params["gate_w"].shape[1]
    E_a = params["aw1"].shape[0]
    ch = params["ew1"].shape[-1]
    dtype = x.dtype
    itemsize = jnp.dtype(dtype).itemsize

    # routing + aux losses: tiny E-wide GEMM, plain XLA in f32
    cw, balance_loss, router_z_loss = _routing_and_losses(params, x, num_selected)

    # token tiling: aim for >= 2 tiles so v7x's two TensorCores both get work
    T = B * N
    tm = max(8, (tm // 8) * 8)
    tm_eff = min(tm, _round_up(max(-(-T // 2), 8), 8))
    T_pad = _round_up(T, tm_eff)
    num_tiles = T_pad // tm_eff

    x_pad = jnp.pad(x.reshape(T, mm), ((0, T_pad - T), (0, 0)))
    cw_pad = jnp.pad(cw, ((0, T_pad - T), (0, 0)))                  # f32, padded rows = 0

    esched, asched, count = _build_schedule(cw_pad, num_tiles, tm_eff, E)

    cap = _vmem_capacity_bytes()
    budget = int(0.85 * cap)
    resident, tn_eff, need = _plan(mm, ch, E, E_a, tm_eff, itemsize, budget,
                                   force_streaming, tn)
    vmem_limit = int(min(max(need + (8 << 20), 32 << 20), int(0.9 * cap)))
    cost = _cost_estimate(T_pad, num_tiles, mm, ch, E, E_a, itemsize, resident)

    res3, x23, x13 = _call_moe(esched, asched, count, x_pad, cw_pad, params,
                               tm=tm_eff, tn=tn_eff, resident=resident,
                               vmem_limit_bytes=vmem_limit, cost=cost)

    def merge(o):                               # (J, T_pad, tn) -> (T_pad, ch)
        return jnp.transpose(o, (1, 0, 2)).reshape(T_pad, ch)

    results = merge(res3)[:T].reshape(B, N, ch)

    # DiffLoss(proj1(x), experts[0](x)) via the Gram-matrix identity:
    # mean((X1n^T X2n)^2) == sum((X1n X1n^T) * (X2n X2n^T)) / D^2  (exact).
    x1 = merge(x13)[:T].reshape(B, -1).astype(jnp.float32)
    x2 = merge(x23)[:T].reshape(B, -1).astype(jnp.float32)
    x1n = x1 / (jnp.linalg.norm(x1, axis=1, keepdims=True) + 1e-6)
    x2n = x2 / (jnp.linalg.norm(x2, axis=1, keepdims=True) + 1e-6)
    D = x1.shape[1]
    diff_loss = jnp.sum((x1n @ x1n.T) * (x2n @ x2n.T)) / float(D * D)

    return results, balance_loss, router_z_loss, diff_loss


# ------------------------- pure-JAX reference (checks) ------------------------

def _reference_forward(params, x, num_selected):
    B, N, mm = x.shape
    E = params["gate_w"].shape[1]
    ch = params["ew1"].shape[-1]
    cw, balance_loss, router_z_loss = _routing_and_losses(params, x, num_selected)
    xf = x.reshape(-1, mm).astype(jnp.float32)
    hp = jax.lax.Precision.HIGHEST

    def mlp(w1, b1, w2, b2):
        h = _gelu_exact(jnp.dot(xf, w1.astype(jnp.float32), precision=hp)
                        + b1.astype(jnp.float32))
        return jnp.dot(h, w2.astype(jnp.float32), precision=hp) + b2.astype(jnp.float32)

    x1 = mlp(params["p1w1"], params["p1b1"], params["p1w2"], params["p1b2"])
    outs, x2 = [], None
    for e in range(E):
        oe = mlp(params["ew1"][e], params["eb1"][e], params["ew2"][e], params["eb2"][e])
        if e == 0:
            x2 = oe
        else:
            oe = oe + mlp(params["aw1"][e - 1], params["ab1"][e - 1],
                          params["aw2"][e - 1], params["ab2"][e - 1])
        outs.append(oe)
    res = sum(cw[:, e:e + 1] * outs[e] for e in range(E))
    results = res.reshape(B, N, ch).astype(x.dtype)

    x1b = x1.reshape(B, -1); x2b = x2.reshape(B, -1)
    x1n = x1b / (jnp.linalg.norm(x1b, axis=1, keepdims=True) + 1e-6)
    x2n = x2b / (jnp.linalg.norm(x2b, axis=1, keepdims=True) + 1e-6)
    diff = jnp.mean(jnp.square(x1n.T @ x2n))
    return results, balance_loss, router_z_loss, diff


if __name__ == "__main__":
    B, N = 2, 16
    mm_channels, channels = 64, 256
    num_experts, num_selected = 4, 2

    key = jax.random.PRNGKey(0)
    kp, kx = jax.random.split(key)
    params = init_params(kp, num_experts, mm_channels, channels, dtype=jnp.float32)
    x = jax.random.normal(kx, (B, N, mm_channels), jnp.float32)

    # run both weight-residency / channel-tiling paths
    fwd_auto = jax.jit(functools.partial(mlp_moe_forward, num_selected=num_selected))
    fwd_stream = jax.jit(functools.partial(mlp_moe_forward, num_selected=num_selected,
                                           force_streaming=True, tn=128))
    out_auto = jax.block_until_ready(fwd_auto(params, x))
    out_stream = jax.block_until_ready(fwd_stream(params, x))

    ref = jax.block_until_ready(
        jax.jit(functools.partial(_reference_forward, num_selected=num_selected))(params, x))
    ref_res, ref_bal, ref_z, ref_diff = ref

    for out in (out_auto, out_stream):
        results, bal, z, diff = out
        assert results.shape == (B, N, channels)
        assert bool(jnp.all(jnp.isfinite(results)))
        assert bool(jnp.allclose(results, ref_res, rtol=2e-2, atol=1e-4))
        for v, r in ((bal, ref_bal), (z, ref_z), (diff, ref_diff)):
            assert v.shape == () and bool(jnp.isfinite(v))
            assert bool(jnp.allclose(v, r, rtol=2e-2, atol=1e-4))
    assert bool(jnp.allclose(out_auto[0], out_stream[0], rtol=1e-3, atol=1e-5))

    print("KERNEL_OK")
</pallas_src>

<mosaic_0001>
module attributes {stable_mosaic.version = 11 : i64} {
  func.func @moe_kernel(%arg0: i32, %arg1: i32, %arg2: i32, %arg3: memref<8xi32, #tpu.memory_space<smem>>, %arg4: memref<8xi32, #tpu.memory_space<smem>>, %arg5: memref<2xi32, #tpu.memory_space<smem>>, %arg6: memref<16x64xf32, #tpu.memory_space<vmem>>, %arg7: memref<16x4xf32, #tpu.memory_space<vmem>>, %arg8: memref<4x64x256xf32, #tpu.memory_space<vmem>>, %arg9: memref<4x1x256xf32, #tpu.memory_space<vmem>>, %arg10: memref<4x256x256xf32, #tpu.memory_space<vmem>>, %arg11: memref<4x1x256xf32, #tpu.memory_space<vmem>>, %arg12: memref<3x64x256xf32, #tpu.memory_space<vmem>>, %arg13: memref<3x1x256xf32, #tpu.memory_space<vmem>>, %arg14: memref<3x256x256xf32, #tpu.memory_space<vmem>>, %arg15: memref<3x1x256xf32, #tpu.memory_space<vmem>>, %arg16: memref<64x256xf32, #tpu.memory_space<vmem>>, %arg17: memref<1x256xf32, #tpu.memory_space<vmem>>, %arg18: memref<256x256xf32, #tpu.memory_space<vmem>>, %arg19: memref<1x256xf32, #tpu.memory_space<vmem>>, %arg20: memref<1x16x256xf32, #tpu.memory_space<vmem>>, %arg21: memref<1x16x256xf32, #tpu.memory_space<vmem>>, %arg22: memref<1x16x256xf32, #tpu.memory_space<vmem>>, %arg23: memref<16x256xf32, #tpu.memory_space<vmem>>, %arg24: memref<16x256xf32, #tpu.memory_space<vmem>>, %arg25: memref<16x256xf32, #tpu.memory_space<vmem>>, %arg26: memref<1x16x256xf32, #tpu.memory_space<vmem>>) attributes {dimension_semantics = [#tpu.dimension_semantics<parallel>, #tpu.dimension_semantics<arbitrary>, #tpu.dimension_semantics<arbitrary>], iteration_bounds = array<i64: 2, 4, 1>, scalar_prefetch = 3 : i64, scratch_operands = 4 : i64, tpu.core_type = #tpu.core_type<tc>, window_params = [{transform_indices = @transform_0, window_bounds = array<i64: 16, 64>}, {transform_indices = @transform_1, window_bounds = array<i64: 16, 4>}, {pipeline_mode = #tpu.pipeline_mode<synchronous>, transform_indices = @transform_2, window_bounds = array<i64: 4, 64, 256>}, {pipeline_mode = #tpu.pipeline_mode<synchronous>, transform_indices = @transform_3, window_bounds = array<i64: 4, 1, 256>}, {pipeline_mode = #tpu.pipeline_mode<synchronous>, transform_indices = @transform_4, window_bounds = array<i64: 4, 256, 256>}, {pipeline_mode = #tpu.pipeline_mode<synchronous>, transform_indices = @transform_5, window_bounds = array<i64: 4, 1, 256>}, {pipeline_mode = #tpu.pipeline_mode<synchronous>, transform_indices = @transform_6, window_bounds = array<i64: 3, 64, 256>}, {pipeline_mode = #tpu.pipeline_mode<synchronous>, transform_indices = @transform_7, window_bounds = array<i64: 3, 1, 256>}, {pipeline_mode = #tpu.pipeline_mode<synchronous>, transform_indices = @transform_8, window_bounds = array<i64: 3, 256, 256>}, {pipeline_mode = #tpu.pipeline_mode<synchronous>, transform_indices = @transform_9, window_bounds = array<i64: 3, 1, 256>}, {pipeline_mode = #tpu.pipeline_mode<synchronous>, transform_indices = @transform_10, window_bounds = array<i64: 64, 256>}, {pipeline_mode = #tpu.pipeline_mode<synchronous>, transform_indices = @transform_11, window_bounds = array<i64: 1, 256>}, {pipeline_mode = #tpu.pipeline_mode<synchronous>, transform_indices = @transform_12, window_bounds = array<i64: 256, 256>}, {pipeline_mode = #tpu.pipeline_mode<synchronous>, transform_indices = @transform_13, window_bounds = array<i64: 1, 256>}, {transform_indices = @transform_14, window_bounds = array<i64: 1, 16, 256>}, {transform_indices = @transform_15, window_bounds = array<i64: 1, 16, 256>}, {transform_indices = @transform_16, window_bounds = array<i64: 1, 16, 256>}]} {
    %c4_i32 = arith.constant 4 : i32
    %0 = arith.muli %arg0, %c4_i32 : i32
    %1 = arith.addi %0, %arg1 : i32
    %2 = arith.index_cast %1 : i32 to index
    %3 = memref.load %arg3[%2] : memref<8xi32, #tpu.memory_space<smem>>
    %4 = arith.index_cast %arg0 : i32 to index
    %5 = memref.load %arg5[%4] : memref<2xi32, #tpu.memory_space<smem>>
    %6 = arith.cmpi slt, %arg1, %5 : i32
    %c1_i32 = arith.constant 1 : i32
    %7 = arith.subi %3, %c1_i32 : i32
    %c0_i32 = arith.constant 0 : i32
    %8 = arith.maxsi %7, %c0_i32 : i32
    %c0_i32_0 = arith.constant 0 : i32
    %9 = arith.cmpi eq, %arg2, %c0_i32_0 : i32
    %c0_i32_1 = arith.constant 0 : i32
    %10 = arith.cmpi eq, %arg1, %c0_i32_1 : i32
    %11 = arith.andi %9, %10 : i1
    %12 = arith.extui %11 : i1 to i32
    %c0_i32_2 = arith.constant 0 : i32
    %13 = arith.cmpi ne, %12, %c0_i32_2 : i32
    scf.if %13 {
      %cst_13 = arith.constant 0.000000e+00 : f32
      %38 = vector.broadcast %cst_13 : f32 to vector<1x16x256xf32>
      %c0_14 = arith.constant 0 : index
      %c0_15 = arith.constant 0 : index
      %c0_16 = arith.constant 0 : index
      %39 = vector.load %arg26[%c0_14, %c0_15, %c0_16] : memref<1x16x256xf32, #tpu.memory_space<vmem>>, vector<1x16x256xf32>
      tpu.vector_store %arg26[%c0_14, %c0_15, %c0_16], %38 {strides = array<i32>} : memref<1x16x256xf32, #tpu.memory_space<vmem>>, vector<1x16x256xf32>,
      %c0_17 = arith.constant 0 : index
      %c0_18 = arith.constant 0 : index
      %40 = vector.load %arg6[%c0_17, %c0_18] : memref<16x64xf32, #tpu.memory_space<vmem>>, vector<16x64xf32>
      %c0_19 = arith.constant 0 : index
      %c0_20 = arith.constant 0 : index
      %41 = vector.load %arg16[%c0_19, %c0_20] : memref<64x256xf32, #tpu.memory_space<vmem>>, vector<64x256xf32>
      %c0_21 = arith.constant 0 : index
      %c0_22 = arith.constant 0 : index
      %42 = vector.load %arg17[%c0_21, %c0_22] : memref<1x256xf32, #tpu.memory_space<vmem>>, vector<1x256xf32>
      %cst_23 = arith.constant dense<0.000000e+00> : vector<16x256xf32>
      %43 = tpu.matmul %40, %41, %cst_23 {dimension_numbers = #tpu.dot_dimension_numbers<[1], [0], [0], [1], [0, 0, 1, 1], [], []>} : vector<16x64xf32>, vector<64x256xf32>, vector<16x256xf32> -> vector<16x256xf32>
      %44 = vector.broadcast %42 : vector<1x256xf32> to vector<16x256xf32>
      %45 = arith.addf %43, %44 : vector<16x256xf32>
      %cst_24 = arith.constant 5.000000e-01 : f32
      %46 = vector.broadcast %cst_24 : f32 to vector<16x256xf32>
      %47 = arith.mulf %46, %45 : vector<16x256xf32>
      %cst_25 = arith.constant 0.707106769 : f32
      %48 = vector.broadcast %cst_25 : f32 to vector<16x256xf32>
      %49 = arith.mulf %45, %48 : vector<16x256xf32>
      %50 = math.erf %49 : vector<16x256xf32>
      %cst_26 = arith.constant 1.000000e+00 : f32
      %51 = vector.broadcast %cst_26 : f32 to vector<16x256xf32>
      %52 = arith.addf %51, %50 : vector<16x256xf32>
      %53 = arith.mulf %47, %52 : vector<16x256xf32>
      %c0_27 = arith.constant 0 : index
      %c0_28 = arith.constant 0 : index
      %54 = vector.load %arg23[%c0_27, %c0_28] : memref<16x256xf32, #tpu.memory_space<vmem>>, vector<16x256xf32>
      tpu.vector_store %arg23[%c0_27, %c0_28], %53 {strides = array<i32>} : memref<16x256xf32, #tpu.memory_space<vmem>>, vector<16x256xf32>,
      %55 = arith.index_cast %3 : i32 to index
      %c0_29 = arith.constant 0 : index
      %c0_30 = arith.constant 0 : index
      %56 = vector.load %arg8[%55, %c0_29, %c0_30] : memref<4x64x256xf32, #tpu.memory_space<vmem>>, vector<1x64x256xf32>
      %57 = vector.shape_cast %56 : vector<1x64x256xf32> to vector<64x256xf32>
      %58 = arith.index_cast %3 : i32 to index
      %c0_31 = arith.constant 0 : index
      %c0_32 = arith.constant 0 : index
      %59 = vector.load %arg9[%58, %c0_31, %c0_32] : memref<4x1x256xf32, #tpu.memory_space<vmem>>, vector<1x1x256xf32>
      %60 = vector.shape_cast %59 : vector<1x1x256xf32> to vector<1x256xf32>
      %cst_33 = arith.constant dense<0.000000e+00> : vector<16x256xf32>
      %61 = tpu.matmul %40, %57, %cst_33 {dimension_numbers = #tpu.dot_dimension_numbers<[1], [0], [0], [1], [0, 0, 1, 1], [], []>} : vector<16x64xf32>, vector<64x256xf32>, vector<16x256xf32> -> vector<16x256xf32>
      %62 = vector.broadcast %60 : vector<1x256xf32> to vector<16x256xf32>
      %63 = arith.addf %61, %62 : vector<16x256xf32>
      %cst_34 = arith.constant 5.000000e-01 : f32
      %64 = vector.broadcast %cst_34 : f32 to vector<16x256xf32>
      %65 = arith.mulf %64, %63 : vector<16x256xf32>
      %cst_35 = arith.constant 0.707106769 : f32
      %66 = vector.broadcast %cst_35 : f32 to vector<16x256xf32>
      %67 = arith.mulf %63, %66 : vector<16x256xf32>
      %68 = math.erf %67 : vector<16x256xf32>
      %cst_36 = arith.constant 1.000000e+00 : f32
      %69 = vector.broadcast %cst_36 : f32 to vector<16x256xf32>
      %70 = arith.addf %69, %68 : vector<16x256xf32>
      %71 = arith.mulf %65, %70 : vector<16x256xf32>
      %c0_37 = arith.constant 0 : index
      %c0_38 = arith.constant 0 : index
      %72 = vector.load %arg24[%c0_37, %c0_38] : memref<16x256xf32, #tpu.memory_space<vmem>>, vector<16x256xf32>
      tpu.vector_store %arg24[%c0_37, %c0_38], %71 {strides = array<i32>} : memref<16x256xf32, #tpu.memory_space<vmem>>, vector<16x256xf32>,
    } else {
    }
    %c0_i32_3 = arith.constant 0 : i32
    %14 = arith.cmpi eq, %arg2, %c0_i32_3 : i32
    %c0_i32_4 = arith.constant 0 : i32
    %15 = arith.cmpi sgt, %arg1, %c0_i32_4 : i32
    %16 = arith.andi %15, %6 : i1
    %17 = arith.andi %14, %16 : i1
    %18 = arith.extui %17 : i1 to i32
    %c0_i32_5 = arith.constant 0 : i32
    %19 = arith.cmpi ne, %18, %c0_i32_5 : i32
    scf.if %19 {
      %c0_13 = arith.constant 0 : index
      %c0_14 = arith.constant 0 : index
      %38 = vector.load %arg6[%c0_13, %c0_14] : memref<16x64xf32, #tpu.memory_space<vmem>>, vector<16x64xf32>
      %39 = arith.index_cast %3 : i32 to index
      %c0_15 = arith.constant 0 : index
      %c0_16 = arith.constant 0 : index
      %40 = vector.load %arg8[%39, %c0_15, %c0_16] : memref<4x64x256xf32, #tpu.memory_space<vmem>>, vector<1x64x256xf32>
      %41 = vector.shape_cast %40 : vector<1x64x256xf32> to vector<64x256xf32>
      %42 = arith.index_cast %3 : i32 to index
      %c0_17 = arith.constant 0 : index
      %c0_18 = arith.constant 0 : index
      %43 = vector.load %arg9[%42, %c0_17, %c0_18] : memref<4x1x256xf32, #tpu.memory_space<vmem>>, vector<1x1x256xf32>
      %44 = vector.shape_cast %43 : vector<1x1x256xf32> to vector<1x256xf32>
      %cst_19 = arith.constant dense<0.000000e+00> : vector<16x256xf32>
      %45 = tpu.matmul %38, %41, %cst_19 {dimension_numbers = #tpu.dot_dimension_numbers<[1], [0], [0], [1], [0, 0, 1, 1], [], []>} : vector<16x64xf32>, vector<64x256xf32>, vector<16x256xf32> -> vector<16x256xf32>
      %46 = vector.broadcast %44 : vector<1x256xf32> to vector<16x256xf32>
      %47 = arith.addf %45, %46 : vector<16x256xf32>
      %cst_20 = arith.constant 5.000000e-01 : f32
      %48 = vector.broadcast %cst_20 : f32 to vector<16x256xf32>
      %49 = arith.mulf %48, %47 : vector<16x256xf32>
      %cst_21 = arith.constant 0.707106769 : f32
      %50 = vector.broadcast %cst_21 : f32 to vector<16x256xf32>
      %51 = arith.mulf %47, %50 : vector<16x256xf32>
      %52 = math.erf %51 : vector<16x256xf32>
      %cst_22 = arith.constant 1.000000e+00 : f32
      %53 = vector.broadcast %cst_22 : f32 to vector<16x256xf32>
      %54 = arith.addf %53, %52 : vector<16x256xf32>
      %55 = arith.mulf %49, %54 : vector<16x256xf32>
      %c0_23 = arith.constant 0 : index
      %c0_24 = arith.constant 0 : index
      %56 = vector.load %arg24[%c0_23, %c0_24] : memref<16x256xf32, #tpu.memory_space<vmem>>, vector<16x256xf32>
      tpu.vector_store %arg24[%c0_23, %c0_24], %55 {strides = array<i32>} : memref<16x256xf32, #tpu.memory_space<vmem>>, vector<16x256xf32>,
      %57 = arith.index_cast %8 : i32 to index
      %c0_25 = arith.constant 0 : index
      %c0_26 = arith.constant 0 : index
      %58 = vector.load %arg12[%57, %c0_25, %c0_26] : memref<3x64x256xf32, #tpu.memory_space<vmem>>, vector<1x64x256xf32>
      %59 = vector.shape_cast %58 : vector<1x64x256xf32> to vector<64x256xf32>
      %60 = arith.index_cast %8 : i32 to index
      %c0_27 = arith.constant 0 : index
      %c0_28 = arith.constant 0 : index
      %61 = vector.load %arg13[%60, %c0_27, %c0_28] : memref<3x1x256xf32, #tpu.memory_space<vmem>>, vector<1x1x256xf32>
      %62 = vector.shape_cast %61 : vector<1x1x256xf32> to vector<1x256xf32>
      %cst_29 = arith.constant dense<0.000000e+00> : vector<16x256xf32>
      %63 = tpu.matmul %38, %59, %cst_29 {dimension_numbers = #tpu.dot_dimension_numbers<[1], [0], [0], [1], [0, 0, 1, 1], [], []>} : vector<16x64xf32>, vector<64x256xf32>, vector<16x256xf32> -> vector<16x256xf32>
      %64 = vector.broadcast %62 : vector<1x256xf32> to vector<16x256xf32>
      %65 = arith.addf %63, %64 : vector<16x256xf32>
      %cst_30 = arith.constant 5.000000e-01 : f32
      %66 = vector.broadcast %cst_30 : f32 to vector<16x256xf32>
      %67 = arith.mulf %66, %65 : vector<16x256xf32>
      %cst_31 = arith.constant 0.707106769 : f32
      %68 = vector.broadcast %cst_31 : f32 to vector<16x256xf32>
      %69 = arith.mulf %65, %68 : vector<16x256xf32>
      %70 = math.erf %69 : vector<16x256xf32>
      %cst_32 = arith.constant 1.000000e+00 : f32
      %71 = vector.broadcast %cst_32 : f32 to vector<16x256xf32>
      %72 = arith.addf %71, %70 : vector<16x256xf32>
      %73 = arith.mulf %67, %72 : vector<16x256xf32>
      %c0_33 = arith.constant 0 : index
      %c0_34 = arith.constant 0 : index
      %74 = vector.load %arg25[%c0_33, %c0_34] : memref<16x256xf32, #tpu.memory_space<vmem>>, vector<16x256xf32>
      tpu.vector_store %arg25[%c0_33, %c0_34], %73 {strides = array<i32>} : memref<16x256xf32, #tpu.memory_space<vmem>>, vector<16x256xf32>,
    } else {
    }
    %20 = tpu.iota {dimensions = array<i32: 1>} : vector<16x4xi32>
    %21 = vector.broadcast %3 : i32 to vector<16x4xi32>
    %22 = arith.cmpi eq, %20, %21 : vector<16x4xi32>
    %c0 = arith.constant 0 : index
    %c0_6 = arith.constant 0 : index
    %23 = vector.load %arg7[%c0, %c0_6] : memref<16x4xf32, #tpu.memory_space<vmem>>, vector<16x4xf32>
    %cst = arith.constant 0.000000e+00 : f32
    %24 = vector.broadcast %cst : f32 to vector<16x4xf32>
    %25 = arith.select %22, %23, %24 : vector<16x4xi1>, vector<16x4xf32>
    %cst_7 = arith.constant dense<0.000000e+00> : vector<16xf32>
    %26 = vector.multi_reduction <add>, %25, %cst_7 [1] : vector<16x4xf32> to vector<16xf32>
    %27 = vector.shape_cast %26 : vector<16xf32> to vector<16x1xf32>
    %c0_i32_8 = arith.constant 0 : i32
    %28 = arith.cmpi eq, %arg1, %c0_i32_8 : i32
    %29 = arith.extui %28 : i1 to i32
    %c0_i32_9 = arith.constant 0 : i32
    %30 = arith.cmpi ne, %29, %c0_i32_9 : i32
    scf.if %30 {
      %38 = arith.index_cast %3 : i32 to index
      %c0_13 = arith.constant 0 : index
      %c0_14 = arith.constant 0 : index
      %39 = vector.load %arg10[%38, %c0_13, %c0_14] : memref<4x256x256xf32, #tpu.memory_space<vmem>>, vector<1x256x256xf32>
      %40 = vector.shape_cast %39 : vector<1x256x256xf32> to vector<256x256xf32>
      %41 = arith.index_cast %3 : i32 to index
      %c0_15 = arith.constant 0 : index
      %c0_16 = arith.constant 0 : index
      %42 = vector.load %arg11[%41, %c0_15, %c0_16] : memref<4x1x256xf32, #tpu.memory_space<vmem>>, vector<1x1x256xf32>
      %43 = vector.shape_cast %42 : vector<1x1x256xf32> to vector<1x256xf32>
      %c0_17 = arith.constant 0 : index
      %c0_18 = arith.constant 0 : index
      %44 = vector.load %arg24[%c0_17, %c0_18] : memref<16x256xf32, #tpu.memory_space<vmem>>, vector<16x256xf32>
      %cst_19 = arith.constant dense<0.000000e+00> : vector<16x256xf32>
      %45 = tpu.matmul %44, %40, %cst_19 {dimension_numbers = #tpu.dot_dimension_numbers<[1], [0], [0], [1], [0, 0, 1, 1], [], []>} : vector<16x256xf32>, vector<256x256xf32>, vector<16x256xf32> -> vector<16x256xf32>
      %46 = vector.broadcast %43 : vector<1x256xf32> to vector<16x256xf32>
      %47 = arith.addf %45, %46 : vector<16x256xf32>
      %48 = arith.index_cast %arg2 : i32 to index
      %c0_20 = arith.constant 0 : index
      %c0_21 = arith.constant 0 : index
      %49 = vector.load %arg21[%48, %c0_20, %c0_21] : memref<1x16x256xf32, #tpu.memory_space<vmem>>, vector<1x16x256xf32>
      %50 = vector.shape_cast %49 : vector<1x16x256xf32> to vector<16x256xf32>
      %51 = vector.shape_cast %47 : vector<16x256xf32> to vector<1x16x256xf32>
      tpu.vector_store %arg21[%48, %c0_20, %c0_21], %51 {strides = array<i32>} : memref<1x16x256xf32, #tpu.memory_space<vmem>>, vector<1x16x256xf32>,
      %52 = arith.index_cast %arg2 : i32 to index
      %c0_22 = arith.constant 0 : index
      %c0_23 = arith.constant 0 : index
      %53 = vector.load %arg26[%52, %c0_22, %c0_23] : memref<1x16x256xf32, #tpu.memory_space<vmem>>, vector<1x16x256xf32>
      %54 = vector.shape_cast %53 : vector<1x16x256xf32> to vector<16x256xf32>
      %55 = vector.broadcast %27 : vector<16x1xf32> to vector<16x256xf32>
      %56 = arith.mulf %55, %47 : vector<16x256xf32>
      %57 = arith.addf %54, %56 : vector<16x256xf32>
      %58 = arith.index_cast %arg2 : i32 to index
      %c0_24 = arith.constant 0 : index
      %c0_25 = arith.constant 0 : index
      %59 = vector.load %arg26[%58, %c0_24, %c0_25] : memref<1x16x256xf32, #tpu.memory_space<vmem>>, vector<1x16x256xf32>
      %60 = vector.shape_cast %59 : vector<1x16x256xf32> to vector<16x256xf32>
      %61 = vector.shape_cast %57 : vector<16x256xf32> to vector<1x16x256xf32>
      tpu.vector_store %arg26[%58, %c0_24, %c0_25], %61 {strides = array<i32>} : memref<1x16x256xf32, #tpu.memory_space<vmem>>, vector<1x16x256xf32>,
      %c0_26 = arith.constant 0 : index
      %c0_27 = arith.constant 0 : index
      %62 = vector.load %arg18[%c0_26, %c0_27] : memref<256x256xf32, #tpu.memory_space<vmem>>, vector<256x256xf32>
      %c0_28 = arith.constant 0 : index
      %c0_29 = arith.constant 0 : index
      %63 = vector.load %arg19[%c0_28, %c0_29] : memref<1x256xf32, #tpu.memory_space<vmem>>, vector<1x256xf32>
      %c0_30 = arith.constant 0 : index
      %c0_31 = arith.constant 0 : index
      %64 = vector.load %arg23[%c0_30, %c0_31] : memref<16x256xf32, #tpu.memory_space<vmem>>, vector<16x256xf32>
      %cst_32 = arith.constant dense<0.000000e+00> : vector<16x256xf32>
      %65 = tpu.matmul %64, %62, %cst_32 {dimension_numbers = #tpu.dot_dimension_numbers<[1], [0], [0], [1], [0, 0, 1, 1], [], []>} : vector<16x256xf32>, vector<256x256xf32>, vector<16x256xf32> -> vector<16x256xf32>
      %66 = vector.broadcast %63 : vector<1x256xf32> to vector<16x256xf32>
      %67 = arith.addf %65, %66 : vector<16x256xf32>
      %68 = arith.index_cast %arg2 : i32 to index
      %c0_33 = arith.constant 0 : index
      %c0_34 = arith.constant 0 : index
      %69 = vector.load %arg22[%68, %c0_33, %c0_34] : memref<1x16x256xf32, #tpu.memory_space<vmem>>, vector<1x16x256xf32>
      %70 = vector.shape_cast %69 : vector<1x16x256xf32> to vector<16x256xf32>
      %71 = vector.shape_cast %67 : vector<16x256xf32> to vector<1x16x256xf32>
      tpu.vector_store %arg22[%68, %c0_33, %c0_34], %71 {strides = array<i32>} : memref<1x16x256xf32, #tpu.memory_space<vmem>>, vector<1x16x256xf32>,
    } else {
    }
    %c0_i32_10 = arith.constant 0 : i32
    %31 = arith.cmpi sgt, %arg1, %c0_i32_10 : i32
    %32 = arith.andi %31, %6 : i1
    %33 = arith.extui %32 : i1 to i32
    %c0_i32_11 = arith.constant 0 : i32
    %34 = arith.cmpi ne, %33, %c0_i32_11 : i32
    scf.if %34 {
      %38 = arith.index_cast %3 : i32 to index
      %c0_13 = arith.constant 0 : index
      %c0_14 = arith.constant 0 : index
      %39 = vector.load %arg10[%38, %c0_13, %c0_14] : memref<4x256x256xf32, #tpu.memory_space<vmem>>, vector<1x256x256xf32>
      %40 = vector.shape_cast %39 : vector<1x256x256xf32> to vector<256x256xf32>
      %41 = arith.index_cast %3 : i32 to index
      %c0_15 = arith.constant 0 : index
      %c0_16 = arith.constant 0 : index
      %42 = vector.load %arg11[%41, %c0_15, %c0_16] : memref<4x1x256xf32, #tpu.memory_space<vmem>>, vector<1x1x256xf32>
      %43 = vector.shape_cast %42 : vector<1x1x256xf32> to vector<1x256xf32>
      %c0_17 = arith.constant 0 : index
      %c0_18 = arith.constant 0 : index
      %44 = vector.load %arg24[%c0_17, %c0_18] : memref<16x256xf32, #tpu.memory_space<vmem>>, vector<16x256xf32>
      %cst_19 = arith.constant dense<0.000000e+00> : vector<16x256xf32>
      %45 = tpu.matmul %44, %40, %cst_19 {dimension_numbers = #tpu.dot_dimension_numbers<[1], [0], [0], [1], [0, 0, 1, 1], [], []>} : vector<16x256xf32>, vector<256x256xf32>, vector<16x256xf32> -> vector<16x256xf32>
      %46 = vector.broadcast %43 : vector<1x256xf32> to vector<16x256xf32>
      %47 = arith.addf %45, %46 : vector<16x256xf32>
      %48 = arith.index_cast %8 : i32 to index
      %c0_20 = arith.constant 0 : index
      %c0_21 = arith.constant 0 : index
      %49 = vector.load %arg14[%48, %c0_20, %c0_21] : memref<3x256x256xf32, #tpu.memory_space<vmem>>, vector<1x256x256xf32>
      %50 = vector.shape_cast %49 : vector<1x256x256xf32> to vector<256x256xf32>
      %51 = arith.index_cast %8 : i32 to index
      %c0_22 = arith.constant 0 : index
      %c0_23 = arith.constant 0 : index
      %52 = vector.load %arg15[%51, %c0_22, %c0_23] : memref<3x1x256xf32, #tpu.memory_space<vmem>>, vector<1x1x256xf32>
      %53 = vector.shape_cast %52 : vector<1x1x256xf32> to vector<1x256xf32>
      %c0_24 = arith.constant 0 : index
      %c0_25 = arith.constant 0 : index
      %54 = vector.load %arg25[%c0_24, %c0_25] : memref<16x256xf32, #tpu.memory_space<vmem>>, vector<16x256xf32>
      %cst_26 = arith.constant dense<0.000000e+00> : vector<16x256xf32>
      %55 = tpu.matmul %54, %50, %cst_26 {dimension_numbers = #tpu.dot_dimension_numbers<[1], [0], [0], [1], [0, 0, 1, 1], [], []>} : vector<16x256xf32>, vector<256x256xf32>, vector<16x256xf32> -> vector<16x256xf32>
      %56 = vector.broadcast %53 : vector<1x256xf32> to vector<16x256xf32>
      %57 = arith.addf %55, %56 : vector<16x256xf32>
      %58 = arith.index_cast %arg2 : i32 to index
      %c0_27 = arith.constant 0 : index
      %c0_28 = arith.constant 0 : index
      %59 = vector.load %arg26[%58, %c0_27, %c0_28] : memref<1x16x256xf32, #tpu.memory_space<vmem>>, vector<1x16x256xf32>
      %60 = vector.shape_cast %59 : vector<1x16x256xf32> to vector<16x256xf32>
      %61 = arith.addf %47, %57 : vector<16x256xf32>
      %62 = vector.broadcast %27 : vector<16x1xf32> to vector<16x256xf32>
      %63 = arith.mulf %62, %61 : vector<16x256xf32>
      %64 = arith.addf %60, %63 : vector<16x256xf32>
      %65 = arith.index_cast %arg2 : i32 to index
      %c0_29 = arith.constant 0 : index
      %c0_30 = arith.constant 0 : index
      %66 = vector.load %arg26[%65, %c0_29, %c0_30] : memref<1x16x256xf32, #tpu.memory_space<vmem>>, vector<1x16x256xf32>
      %67 = vector.shape_cast %66 : vector<1x16x256xf32> to vector<16x256xf32>
      %68 = vector.shape_cast %64 : vector<16x256xf32> to vector<1x16x256xf32>
      tpu.vector_store %arg26[%65, %c0_29, %c0_30], %68 {strides = array<i32>} : memref<1x16x256xf32, #tpu.memory_space<vmem>>, vector<1x16x256xf32>,
    } else {
    }
    %c3_i32 = arith.constant 3 : i32
    %35 = arith.cmpi eq, %arg1, %c3_i32 : i32
    %36 = arith.extui %35 : i1 to i32
    %c0_i32_12 = arith.constant 0 : i32
    %37 = arith.cmpi ne, %36, %c0_i32_12 : i32
    scf.if %37 {
      %38 = arith.index_cast %arg2 : i32 to index
      %c0_13 = arith.constant 0 : index
      %c0_14 = arith.constant 0 : index
      %39 = vector.load %arg26[%38, %c0_13, %c0_14] : memref<1x16x256xf32, #tpu.memory_space<vmem>>, vector<1x16x256xf32>
      %40 = vector.shape_cast %39 : vector<1x16x256xf32> to vector<16x256xf32>
      %41 = arith.index_cast %arg2 : i32 to index
      %c0_15 = arith.constant 0 : index
      %c0_16 = arith.constant 0 : index
      %42 = vector.load %arg20[%41, %c0_15, %c0_16] : memref<1x16x256xf32, #tpu.memory_space<vmem>>, vector<1x16x256xf32>
      %43 = vector.shape_cast %42 : vector<1x16x256xf32> to vector<16x256xf32>
      %44 = vector.shape_cast %40 : vector<16x256xf32> to vector<1x16x256xf32>
      tpu.vector_store %arg20[%41, %c0_15, %c0_16], %44 {strides = array<i32>} : memref<1x16x256xf32, #tpu.memory_space<vmem>>, vector<1x16x256xf32>,
    } else {
    }
    return
  }
  func.func @transform_0(%arg0: i32, %arg1: i32, %arg2: i32, %arg3: memref<8xi32, #tpu.memory_space<smem>>, %arg4: memref<8xi32, #tpu.memory_space<smem>>, %arg5: memref<2xi32, #tpu.memory_space<smem>>) -> (i32, i32) {
    %c0_i32 = arith.constant 0 : i32
    %c0_i32_0 = arith.constant 0 : i32
    return %arg0, %c0_i32 : i32, i32
  }
  func.func @transform_1(%arg0: i32, %arg1: i32, %arg2: i32, %arg3: memref<8xi32, #tpu.memory_space<smem>>, %arg4: memref<8xi32, #tpu.memory_space<smem>>, %arg5: memref<2xi32, #tpu.memory_space<smem>>) -> (i32, i32) {
    %c0_i32 = arith.constant 0 : i32
    %c0_i32_0 = arith.constant 0 : i32
    return %arg0, %c0_i32 : i32, i32
  }
  func.func @transform_2(%arg0: i32, %arg1: i32, %arg2: i32, %arg3: memref<8xi32, #tpu.memory_space<smem>>, %arg4: memref<8xi32, #tpu.memory_space<smem>>, %arg5: memref<2xi32, #tpu.memory_space<smem>>) -> (i32, i32, i32) {
    %c0_i32 = arith.constant 0 : i32
    %c0_i32_0 = arith.constant 0 : i32
    %c0_i32_1 = arith.constant 0 : i32
    %c0_i32_2 = arith.constant 0 : i32
    return %c0_i32, %c0_i32_0, %c0_i32_1 : i32, i32, i32
  }
  func.func @transform_3(%arg0: i32, %arg1: i32, %arg2: i32, %arg3: memref<8xi32, #tpu.memory_space<smem>>, %arg4: memref<8xi32, #tpu.memory_space<smem>>, %arg5: memref<2xi32, #tpu.memory_space<smem>>) -> (i32, i32, i32) {
    %c0_i32 = arith.constant 0 : i32
    %c0_i32_0 = arith.constant 0 : i32
    %c0_i32_1 = arith.constant 0 : i32
    %c0_i32_2 = arith.constant 0 : i32
    return %c0_i32, %c0_i32_0, %c0_i32_1 : i32, i32, i32
  }
  func.func @transform_4(%arg0: i32, %arg1: i32, %arg2: i32, %arg3: memref<8xi32, #tpu.memory_space<smem>>, %arg4: memref<8xi32, #tpu.memory_space<smem>>, %arg5: memref<2xi32, #tpu.memory_space<smem>>) -> (i32, i32, i32) {
    %c0_i32 = arith.constant 0 : i32
    %c0_i32_0 = arith.constant 0 : i32
    %c0_i32_1 = arith.constant 0 : i32
    %c0_i32_2 = arith.constant 0 : i32
    return %c0_i32, %c0_i32_0, %c0_i32_1 : i32, i32, i32
  }
  func.func @transform_5(%arg0: i32, %arg1: i32, %arg2: i32, %arg3: memref<8xi32, #tpu.memory_space<smem>>, %arg4: memref<8xi32, #tpu.memory_space<smem>>, %arg5: memref<2xi32, #tpu.memory_space<smem>>) -> (i32, i32, i32) {
    %c0_i32 = arith.constant 0 : i32
    %c0_i32_0 = arith.constant 0 : i32
    %c0_i32_1 = arith.constant 0 : i32
    %c0_i32_2 = arith.constant 0 : i32
    return %c0_i32, %c0_i32_0, %c0_i32_1 : i32, i32, i32
  }
  func.func @transform_6(%arg0: i32, %arg1: i32, %arg2: i32, %arg3: memref<8xi32, #tpu.memory_space<smem>>, %arg4: memref<8xi32, #tpu.memory_space<smem>>, %arg5: memref<2xi32, #tpu.memory_space<smem>>) -> (i32, i32, i32) {
    %c0_i32 = arith.constant 0 : i32
    %c0_i32_0 = arith.constant 0 : i32
    %c0_i32_1 = arith.constant 0 : i32
    %c0_i32_2 = arith.constant 0 : i32
    return %c0_i32, %c0_i32_0, %c0_i32_1 : i32, i32, i32
  }
  func.func @transform_7(%arg0: i32, %arg1: i32, %arg2: i32, %arg3: memref<8xi32, #tpu.memory_space<smem>>, %arg4: memref<8xi32, #tpu.memory_space<smem>>, %arg5: memref<2xi32, #tpu.memory_space<smem>>) -> (i32, i32, i32) {
    %c0_i32 = arith.constant 0 : i32
    %c0_i32_0 = arith.constant 0 : i32
    %c0_i32_1 = arith.constant 0 : i32
    %c0_i32_2 = arith.constant 0 : i32
    return %c0_i32, %c0_i32_0, %c0_i32_1 : i32, i32, i32
  }
  func.func @transform_8(%arg0: i32, %arg1: i32, %arg2: i32, %arg3: memref<8xi32, #tpu.memory_space<smem>>, %arg4: memref<8xi32, #tpu.memory_space<smem>>, %arg5: memref<2xi32, #tpu.memory_space<smem>>) -> (i32, i32, i32) {
    %c0_i32 = arith.constant 0 : i32
    %c0_i32_0 = arith.constant 0 : i32
    %c0_i32_1 = arith.constant 0 : i32
    %c0_i32_2 = arith.constant 0 : i32
    return %c0_i32, %c0_i32_0, %c0_i32_1 : i32, i32, i32
  }
  func.func @transform_9(%arg0: i32, %arg1: i32, %arg2: i32, %arg3: memref<8xi32, #tpu.memory_space<smem>>, %arg4: memref<8xi32, #tpu.memory_space<smem>>, %arg5: memref<2xi32, #tpu.memory_space<smem>>) -> (i32, i32, i32) {
    %c0_i32 = arith.constant 0 : i32
    %c0_i32_0 = arith.constant 0 : i32
    %c0_i32_1 = arith.constant 0 : i32
    %c0_i32_2 = arith.constant 0 : i32
    return %c0_i32, %c0_i32_0, %c0_i32_1 : i32, i32, i32
  }
  func.func @transform_10(%arg0: i32, %arg1: i32, %arg2: i32, %arg3: memref<8xi32, #tpu.memory_space<smem>>, %arg4: memref<8xi32, #tpu.memory_space<smem>>, %arg5: memref<2xi32, #tpu.memory_space<smem>>) -> (i32, i32) {
    %c0_i32 = arith.constant 0 : i32
    %c0_i32_0 = arith.constant 0 : i32
    %c0_i32_1 = arith.constant 0 : i32
    return %c0_i32, %c0_i32_0 : i32, i32
  }
  func.func @transform_11(%arg0: i32, %arg1: i32, %arg2: i32, %arg3: memref<8xi32, #tpu.memory_space<smem>>, %arg4: memref<8xi32, #tpu.memory_space<smem>>, %arg5: memref<2xi32, #tpu.memory_space<smem>>) -> (i32, i32) {
    %c0_i32 = arith.constant 0 : i32
    %c0_i32_0 = arith.constant 0 : i32
    %c0_i32_1 = arith.constant 0 : i32
    return %c0_i32, %c0_i32_0 : i32, i32
  }
  func.func @transform_12(%arg0: i32, %arg1: i32, %arg2: i32, %arg3: memref<8xi32, #tpu.memory_space<smem>>, %arg4: memref<8xi32, #tpu.memory_space<smem>>, %arg5: memref<2xi32, #tpu.memory_space<smem>>) -> (i32, i32) {
    %c0_i32 = arith.constant 0 : i32
    %c0_i32_0 = arith.constant 0 : i32
    %c0_i32_1 = arith.constant 0 : i32
    return %c0_i32, %c0_i32_0 : i32, i32
  }
  func.func @transform_13(%arg0: i32, %arg1: i32, %arg2: i32, %arg3: memref<8xi32, #tpu.memory_space<smem>>, %arg4: memref<8xi32, #tpu.memory_space<smem>>, %arg5: memref<2xi32, #tpu.memory_space<smem>>) -> (i32, i32) {
    %c0_i32 = arith.constant 0 : i32
    %c0_i32_0 = arith.constant 0 : i32
    %c0_i32_1 = arith.constant 0 : i32
    return %c0_i32, %c0_i32_0 : i32, i32
  }
  func.func @transform_14(%arg0: i32, %arg1: i32, %arg2: i32, %arg3: memref<8xi32, #tpu.memory_space<smem>>, %arg4: memref<8xi32, #tpu.memory_space<smem>>, %arg5: memref<2xi32, #tpu.memory_space<smem>>) -> (i32, i32, i32) {
    %c0_i32 = arith.constant 0 : i32
    %c0_i32_0 = arith.constant 0 : i32
    %c0_i32_1 = arith.constant 0 : i32
    return %c0_i32, %arg0, %c0_i32_0 : i32, i32, i32
  }
  func.func @transform_15(%arg0: i32, %arg1: i32, %arg2: i32, %arg3: memref<8xi32, #tpu.memory_space<smem>>, %arg4: memref<8xi32, #tpu.memory_space<smem>>, %arg5: memref<2xi32, #tpu.memory_space<smem>>) -> (i32, i32, i32) {
    %c0_i32 = arith.constant 0 : i32
    %c0_i32_0 = arith.constant 0 : i32
    %c0_i32_1 = arith.constant 0 : i32
    return %c0_i32, %arg0, %c0_i32_0 : i32, i32, i32
  }
  func.func @transform_16(%arg0: i32, %arg1: i32, %arg2: i32, %arg3: memref<8xi32, #tpu.memory_space<smem>>, %arg4: memref<8xi32, #tpu.memory_space<smem>>, %arg5: memref<2xi32, #tpu.memory_space<smem>>) -> (i32, i32, i32) {
    %c0_i32 = arith.constant 0 : i32
    %c0_i32_0 = arith.constant 0 : i32
    %c0_i32_1 = arith.constant 0 : i32
    return %c0_i32, %arg0, %c0_i32_0 : i32, i32, i32
  }
}

</mosaic_0001>

<llo_original>
// kernel: mlp_moe_forward.1
$region0: #{mlp_moe_forward.1}
  #allocation0 [shape = 'u32[]', space=smem, size = 0x4, offset = 0x4, fixed_abs, tag = 'smem constant byte address 0x4 - core index']
  #allocation1 [shape = 'u32[144,128]{1,0:T(1,128)}', space=vmem, size = 0x12000, scoped, tag = 'internal scratch']
  #allocation2 [shape = 'f32[16,256]{1,0:T(8,128)}', space=vmem, size = 0x4000, scoped, tag = 'scratch operand']
  #allocation3 [shape = 'f32[16,256]{1,0:T(8,128)}', space=vmem, size = 0x4000, scoped, tag = 'scratch operand']
  #allocation4 [shape = 'f32[16,256]{1,0:T(8,128)}', space=vmem, size = 0x4000, scoped, tag = 'scratch operand']
  #allocation5 [shape = 'f32[1,16,256]{2,1,0:T(8,128)}', space=vmem, size = 0x4000, scoped, tag = 'scratch operand']
  #allocation6 [shape = 's32[1]{0}', space=sflag, size = 0x4, scoped, tag = 'scoped memory for mlp_moe_forward.1']
  #allocation7 [shape = 'u8[512]{0}', space=smem, size = 0x200, scoped, tag = 'prefetched SMEM operand 0']
  #allocation8 [shape = 'u8[512]{0}', space=smem, size = 0x200, scoped, tag = 'prefetched SMEM operand 1']
  #allocation9 [shape = 'u8[512]{0}', space=smem, size = 0x200, scoped, tag = 'prefetched SMEM operand 2']
  %s0 = inlined_call_operand.vmem [shape: s32[8], index: 0, kind: input, shape index: {}]
  %s1 = inlined_call_operand.vmem [shape: s32[8], index: 1, kind: input, shape index: {}]
  %s2 = inlined_call_operand.vmem [shape: s32[2], index: 2, kind: input, shape index: {}]
  %s3 = inlined_call_operand.vmem [shape: f32[32,64], index: 3, kind: input, shape index: {}]
  %s4 = inlined_call_operand.vmem [shape: f32[32,4], index: 4, kind: input, shape index: {}]
  %s5 = inlined_call_operand.vmem [shape: f32[4,64,256], index: 5, kind: input, shape index: {}]
  %s6 = inlined_call_operand.vmem [shape: f32[4,1,256], index: 6, kind: input, shape index: {}]
  %s7 = inlined_call_operand.hbm [shape: f32[4,256,256], index: 7, kind: input, shape index: {}]
  %s8 = inlined_call_operand.vmem [shape: f32[4,1,256], index: 8, kind: input, shape index: {}]
  %s9 = inlined_call_operand.hbm [shape: f32[3,64,256], index: 9, kind: input, shape index: {}]
  %s10 = inlined_call_operand.vmem [shape: f32[3,1,256], index: 10, kind: input, shape index: {}]
  %s11 = inlined_call_operand.hbm [shape: f32[3,256,256], index: 11, kind: input, shape index: {}]
  %s12 = inlined_call_operand.vmem [shape: f32[3,1,256], index: 12, kind: input, shape index: {}]
  %s13 = inlined_call_operand.vmem [shape: f32[64,256], index: 13, kind: input, shape index: {}]
  %s14 = inlined_call_operand.vmem [shape: f32[1,256], index: 14, kind: input, shape index: {}]
  %s15 = inlined_call_operand.vmem [shape: f32[256,256], index: 15, kind: input, shape index: {}]
  %s16 = inlined_call_operand.vmem [shape: f32[1,256], index: 16, kind: input, shape index: {}]
  %s17 = inlined_call_operand.hbm [shape: f32[1,32,256], index: 17, kind: output, shape index: {0}]
  %s18 = inlined_call_operand.vmem [shape: f32[1,32,256], index: 18, kind: output, shape index: {1}]
  %s19 = inlined_call_operand.vmem [shape: f32[1,32,256], index: 19, kind: output, shape index: {2}]
  %20 = xla_tuple %s17, %s18, %s19
  %s21 = sld [smem:[#allocation0]]
  $region137: #{mlp_moe_forward.1} parent=0
    _
  %s23 = ssub.s32 1, %s21
  %s24 = scalar_select 0, %s23, %s21
  %s25 = sshll.u32 %s0, 4
  %s26 = int_to_ptr.vmem [resolvable:$true] %s25
  %28 = dma.vmem_to_smem %s26, 16, [#allocation7], [#allocation6]
  %s29 = sshll.u32 %s1, 4
  %s30 = int_to_ptr.vmem [resolvable:$true] %s29
  %32 = dma.vmem_to_smem %s30, 16, [#allocation8], [#allocation6]
  %s33 = sshll.u32 %s2, 4
  %s34 = int_to_ptr.vmem [resolvable:$true] %s33
  %36 = dma.vmem_to_smem %s34, 16, [#allocation9], [#allocation6]
  %37 = dma.done [#allocation6], 48
  %38 = sfence
  $region1: #{mlp_moe_forward.1} parent=0
    #allocation10 [shape = 'u8[1048576]{0}', space=vmem, size = 0x100000, scoped, tag = 'input window, operand 7, single buffered']
    #allocation11 [shape = 's32[2]{0}', space=sflag, size = 0x8, scoped, tag = 'scoped memory for mlp_moe_forward.1']
    #allocation12 [shape = 's32[2]{0}', space=sflag, size = 0x8, scoped, tag = 'scoped memory for mlp_moe_forward.1']
    #allocation13 [shape = 'u8[196608]{0}', space=vmem, size = 0x30000, scoped, tag = 'input window, operand 9, single buffered']
    #allocation14 [shape = 's32[1]{0}', space=sflag, size = 0x4, scoped, tag = 'scoped memory for mlp_moe_forward.1']
    #allocation15 [shape = 'u8[786432]{0}', space=vmem, size = 0xc0000, scoped, tag = 'input window, operand 11, single buffered']
    #allocation16 [shape = 'u8[32768]{0}', space=vmem, size = 0x8000, scoped, tag = 'output window, operand 0']
    %39 = vsyncpa [#allocation11], 0
    %40 = vsyncpa [#allocation14], 0
    %41 = vsyncpa [#allocation12], 0
    %s42 = scalar_lea.sflag [#allocation12], 1
    %43 = vsyncpa %s42, 0
    loop: start=0, step=1, limit=10
    $region2: #{mlp_moe_forward.1} parent=1 // loop_pre_header
      _
    $region3: #{mlp_moe_forward.1} parent=1 // loop_header
      %s45 = sphi 0, %s49
      %p46 = scmp.ge.s32.totalorder %s45, 10
      %s52 = sphi 0, %s71
      %s53 = sphi 0, %s67
      %s54 = sphi 0, %s63
      %s55 = sphi 0, %s52
      %s56 = sphi 0, %s53
      %s57 = sphi 0, %s54
      %s58 = sphi 0, %s55
      %s59 = sphi 0, %s56
      %s60 = sphi 0, %s57
      %s74 = sphi 0, %s76
      %s77 = sphi 0, %s74
      %s78 = sphi 0, %s77
      %s94 = sphi 0, %s78
      %s100 = sphi 0, %s102
      %s103 = sphi 0, %s100
      %s104 = sphi 0, %s103
      %s120 = sphi 0, %s104
      %s124 = sphi 0, %s124
      %s126 = sphi 0, %s124
      %s127 = sphi 0, %s126
      %s141 = sphi 0, %s127
      %s145 = sphi 0, %s145
      %s147 = sphi 0, %s145
      %s148 = sphi 0, %s147
      %s162 = sphi 0, %s148
      %s166 = sphi 0, %s166
      %s168 = sphi 0, %s166
      %s169 = sphi 0, %s168
      %s183 = sphi 0, %s169
      %s187 = sphi 0, %s187
      %s189 = sphi 0, %s187
      %s190 = sphi 0, %s189
      %s204 = sphi 0, %s190
      %s208 = sphi 0, %s208
      %s210 = sphi 0, %s208
      %s211 = sphi 0, %s210
      %s225 = sphi 0, %s211
      %s229 = sphi 0, %s229
      %s231 = sphi 0, %s229
      %s232 = sphi 0, %s231
      %s246 = sphi 0, %s232
      %s250 = sphi 0, %s250
      %s252 = sphi 0, %s250
      %s253 = sphi 0, %s252
      %s267 = sphi 0, %s253
      %s271 = sphi 0, %s271
      %s273 = sphi 0, %s271
      %s274 = sphi 0, %s273
      %s288 = sphi 0, %s274
      %s292 = sphi 0, %s292
      %s294 = sphi 0, %s292
      %s295 = sphi 0, %s294
      %s309 = sphi 0, %s295
      %s313 = sphi 0, %s313
      %s315 = sphi 0, %s313
      %s316 = sphi 0, %s315
      %s330 = sphi 0, %s316
      %s334 = sphi 0, %s334
      %s336 = sphi 0, %s334
      %s337 = sphi 0, %s336
      %s351 = sphi 0, %s337
      %s355 = sphi 0, %s355
      %s357 = sphi 0, %s355
      %s358 = sphi 0, %s357
      %s372 = sphi 0, %s358
      %s378 = sphi 0, %s380
      %s381 = sphi 0, %s378
      %s382 = sphi 0, %s381
      %s398 = sphi 0, %s382
      %s404 = sphi 0, %s406
      %s407 = sphi 0, %s404
      %s408 = sphi 0, %s407
      %s424 = sphi 0, %s408
      %s430 = sphi 0, %s432
      %s433 = sphi 0, %s430
      %s434 = sphi 0, %s433
      %s450 = sphi 0, %s434
    $region4: #{mlp_moe_forward.1} parent=1 // loop_header_branch
      %48 = sbr.rel (%p46) target = $region8
    $region5: #{mlp_moe_forward.1} parent=1 // loop_body
      %s50 = ssub.s32 %s45, 1
      %s51 = ssub.s32 %s45, 2
      %s61 = sadd.s32 1, %s54
      %p62 = scmp.ge.s32.totalorder %s61, 1
      %s63 = scalar_select %p62, 0, %s61
      %s64 = sadd.s32 1, %s53
      %s65 = scalar_select %p62, %s64, %s53
      %p66 = scmp.ge.s32.totalorder %s65, 4
      %s67 = scalar_select %p66, 0, %s65
      %s68 = sadd.s32 1, %s52
      %s69 = scalar_select %p66, %s68, %s52
      %p70 = scmp.ge.s32.totalorder %s69, 2
      %s71 = scalar_select %p70, 0, %s69
      %s72 = ssub.s32 %s52, %s71
      %p73 = scmp.eq.s32.totalorder %s72, 0
      %s75 = sadd.s32 %s74, 1
      %s76 = scalar_select %p73, %s74, %s75
      %p79 = pneg %p73
      %p80 = scmp.eq.s32.totalorder %s45, 7
      %p81 = por %p79, %p80
      %p82 = scmp.ne.s32.totalorder %s74, %s77
      %p83 = scmp.eq.s32.totalorder %s45, 0
      %p84 = por %p82, %p83
      %p85 = scmp.ne.s32.totalorder %s74, %s77
      %p86 = scmp.eq.s32.totalorder %s50, 7
      %p87 = por %p85, %p86
      %p88 = scmp.ne.s32.totalorder %s77, %s78
      %p89 = scmp.eq.s32.totalorder %s50, 0
      %p90 = por %p88, %p89
      %p91 = scmp.ne.s32.totalorder %s77, %s78
      %p92 = scmp.eq.s32.totalorder %s51, 7
      %p93 = por %p91, %p92
      %p95 = scmp.ne.s32.totalorder %s78, %s94
      %p96 = scmp.eq.s32.totalorder %s51, 0
      %p97 = por %p95, %p96
      %s98 = ssub.s32 %s52, %s71
      %p99 = scmp.eq.s32.totalorder %s98, 0
      %s101 = sadd.s32 %s100, 1
      %s102 = scalar_select %p99, %s100, %s101
      %p105 = pneg %p99
      %p106 = scmp.eq.s32.totalorder %s45, 7
      %p107 = por %p105, %p106
      %p108 = scmp.ne.s32.totalorder %s100, %s103
      %p109 = scmp.eq.s32.totalorder %s45, 0
      %p110 = por %p108, %p109
      %p111 = scmp.ne.s32.totalorder %s100, %s103
      %p112 = scmp.eq.s32.totalorder %s50, 7
      %p113 = por %p111, %p112
      %p114 = scmp.ne.s32.totalorder %s103, %s104
      %p115 = scmp.eq.s32.totalorder %s50, 0
      %p116 = por %p114, %p115
      %p117 = scmp.ne.s32.totalorder %s103, %s104
      %p118 = scmp.eq.s32.totalorder %s51, 7
      %p119 = por %p117, %p118
      %p121 = scmp.ne.s32.totalorder %s104, %s120
      %p122 = scmp.eq.s32.totalorder %s51, 0
      %p123 = por %p121, %p122
      %s125 = sadd.s32 %s124, 1
      %p128 = scmp.eq.s32.totalorder %s45, 7
      %p129 = scmp.ne.s32.totalorder %s124, %s126
      %p130 = scmp.eq.s32.totalorder %s45, 0
      %p131 = por %p129, %p130
      %p132 = scmp.ne.s32.totalorder %s124, %s126
      %p133 = scmp.eq.s32.totalorder %s50, 7
      %p134 = por %p132, %p133
      %p135 = scmp.ne.s32.totalorder %s126, %s127
      %p136 = scmp.eq.s32.totalorder %s50, 0
      %p137 = por %p135, %p136
      %p138 = scmp.ne.s32.totalorder %s126, %s127
      %p139 = scmp.eq.s32.totalorder %s51, 7
      %p140 = por %p138, %p139
      %p142 = scmp.ne.s32.totalorder %s127, %s141
      %p143 = scmp.eq.s32.totalorder %s51, 0
      %p144 = por %p142, %p143
      %s146 = sadd.s32 %s145, 1
      %p149 = scmp.eq.s32.totalorder %s45, 7
      %p150 = scmp.ne.s32.totalorder %s145, %s147
      %p151 = scmp.eq.s32.totalorder %s45, 0
      %p152 = por %p150, %p151
      %p153 = scmp.ne.s32.totalorder %s145, %s147
      %p154 = scmp.eq.s32.totalorder %s50, 7
      %p155 = por %p153, %p154
      %p156 = scmp.ne.s32.totalorder %s147, %s148
      %p157 = scmp.eq.s32.totalorder %s50, 0
      %p158 = por %p156, %p157
      %p159 = scmp.ne.s32.totalorder %s147, %s148
      %p160 = scmp.eq.s32.totalorder %s51, 7
      %p161 = por %p159, %p160
      %p163 = scmp.ne.s32.totalorder %s148, %s162
      %p164 = scmp.eq.s32.totalorder %s51, 0
      %p165 = por %p163, %p164
      %s167 = sadd.s32 %s166, 1
      %p170 = scmp.eq.s32.totalorder %s45, 7
      %p171 = scmp.ne.s32.totalorder %s166, %s168
      %p172 = scmp.eq.s32.totalorder %s45, 0
      %p173 = por %p171, %p172
      %p174 = scmp.ne.s32.totalorder %s166, %s168
      %p175 = scmp.eq.s32.totalorder %s50, 7
      %p176 = por %p174, %p175
      %p177 = scmp.ne.s32.totalorder %s168, %s169
      %p178 = scmp.eq.s32.totalorder %s50, 0
      %p179 = por %p177, %p178
      %p180 = scmp.ne.s32.totalorder %s168, %s169
      %p181 = scmp.eq.s32.totalorder %s51, 7
      %p182 = por %p180, %p181
      %p184 = scmp.ne.s32.totalorder %s169, %s183
      %p185 = scmp.eq.s32.totalorder %s51, 0
      %p186 = por %p184, %p185
      %s188 = sadd.s32 %s187, 1
      %p191 = scmp.eq.s32.totalorder %s45, 7
      %p192 = scmp.ne.s32.totalorder %s187, %s189
      %p193 = scmp.eq.s32.totalorder %s45, 0
      %p194 = por %p192, %p193
      %p195 = scmp.ne.s32.totalorder %s187, %s189
      %p196 = scmp.eq.s32.totalorder %s50, 7
      %p197 = por %p195, %p196
      %p198 = scmp.ne.s32.totalorder %s189, %s190
      %p199 = scmp.eq.s32.totalorder %s50, 0
      %p200 = por %p198, %p199
      %p201 = scmp.ne.s32.totalorder %s189, %s190
      %p202 = scmp.eq.s32.totalorder %s51, 7
      %p203 = por %p201, %p202
      %p205 = scmp.ne.s32.totalorder %s190, %s204
      %p206 = scmp.eq.s32.totalorder %s51, 0
      %p207 = por %p205, %p206
      %s209 = sadd.s32 %s208, 1
      %p212 = scmp.eq.s32.totalorder %s45, 7
      %p213 = scmp.ne.s32.totalorder %s208, %s210
      %p214 = scmp.eq.s32.totalorder %s45, 0
      %p215 = por %p213, %p214
      %p216 = scmp.ne.s32.totalorder %s208, %s210
      %p217 = scmp.eq.s32.totalorder %s50, 7
      %p218 = por %p216, %p217
      %p219 = scmp.ne.s32.totalorder %s210, %s211
      %p220 = scmp.eq.s32.totalorder %s50, 0
      %p221 = por %p219, %p220
      %p222 = scmp.ne.s32.totalorder %s210, %s211
      %p223 = scmp.eq.s32.totalorder %s51, 7
      %p224 = por %p222, %p223
      %p226 = scmp.ne.s32.totalorder %s211, %s225
      %p227 = scmp.eq.s32.totalorder %s51, 0
      %p228 = por %p226, %p227
      %s230 = sadd.s32 %s229, 1
      %p233 = scmp.eq.s32.totalorder %s45, 7
      %p234 = scmp.ne.s32.totalorder %s229, %s231
      %p235 = scmp.eq.s32.totalorder %s45, 0
      %p236 = por %p234, %p235
      %p237 = scmp.ne.s32.totalorder %s229, %s231
      %p238 = scmp.eq.s32.totalorder %s50, 7
      %p239 = por %p237, %p238
      %p240 = scmp.ne.s32.totalorder %s231, %s232
      %p241 = scmp.eq.s32.totalorder %s50, 0
      %p242 = por %p240, %p241
      %p243 = scmp.ne.s32.totalorder %s231, %s232
      %p244 = scmp.eq.s32.totalorder %s51, 7
      %p245 = por %p243, %p244
      %p247 = scmp.ne.s32.totalorder %s232, %s246
      %p248 = scmp.eq.s32.totalorder %s51, 0
      %p249 = por %p247, %p248
      %s251 = sadd.s32 %s250, 1
      %p254 = scmp.eq.s32.totalorder %s45, 7
      %p255 = scmp.ne.s32.totalorder %s250, %s252
      %p256 = scmp.eq.s32.totalorder %s45, 0
      %p257 = por %p255, %p256
      %p258 = scmp.ne.s32.totalorder %s250, %s252
      %p259 = scmp.eq.s32.totalorder %s50, 7
      %p260 = por %p258, %p259
      %p261 = scmp.ne.s32.totalorder %s252, %s253
      %p262 = scmp.eq.s32.totalorder %s50, 0
      %p263 = por %p261, %p262
      %p264 = scmp.ne.s32.totalorder %s252, %s253
      %p265 = scmp.eq.s32.totalorder %s51, 7
      %p266 = por %p264, %p265
      %p268 = scmp.ne.s32.totalorder %s253, %s267
      %p269 = scmp.eq.s32.totalorder %s51, 0
      %p270 = por %p268, %p269
      %s272 = sadd.s32 %s271, 1
      %p275 = scmp.eq.s32.totalorder %s45, 7
      %p276 = scmp.ne.s32.totalorder %s271, %s273
      %p277 = scmp.eq.s32.totalorder %s45, 0
      %p278 = por %p276, %p277
      %p279 = scmp.ne.s32.totalorder %s271, %s273
      %p280 = scmp.eq.s32.totalorder %s50, 7
      %p281 = por %p279, %p280
      %p282 = scmp.ne.s32.totalorder %s273, %s274
      %p283 = scmp.eq.s32.totalorder %s50, 0
      %p284 = por %p282, %p283
      %p285 = scmp.ne.s32.totalorder %s273, %s274
      %p286 = scmp.eq.s32.totalorder %s51, 7
      %p287 = por %p285, %p286
      %p289 = scmp.ne.s32.totalorder %s274, %s288
      %p290 = scmp.eq.s32.totalorder %s51, 0
      %p291 = por %p289, %p290
      %s293 = sadd.s32 %s292, 1
      %p296 = scmp.eq.s32.totalorder %s45, 7
      %p297 = scmp.ne.s32.totalorder %s292, %s294
      %p298 = scmp.eq.s32.totalorder %s45, 0
      %p299 = por %p297, %p298
      %p300 = scmp.ne.s32.totalorder %s292, %s294
      %p301 = scmp.eq.s32.totalorder %s50, 7
      %p302 = por %p300, %p301
      %p303 = scmp.ne.s32.totalorder %s294, %s295
      %p304 = scmp.eq.s32.totalorder %s50, 0
      %p305 = por %p303, %p304
      %p306 = scmp.ne.s32.totalorder %s294, %s295
      %p307 = scmp.eq.s32.totalorder %s51, 7
      %p308 = por %p306, %p307
      %p310 = scmp.ne.s32.totalorder %s295, %s309
      %p311 = scmp.eq.s32.totalorder %s51, 0
      %p312 = por %p310, %p311
      %s314 = sadd.s32 %s313, 1
      %p317 = scmp.eq.s32.totalorder %s45, 7
      %p318 = scmp.ne.s32.totalorder %s313, %s315
      %p319 = scmp.eq.s32.totalorder %s45, 0
      %p320 = por %p318, %p319
      %p321 = scmp.ne.s32.totalorder %s313, %s315
      %p322 = scmp.eq.s32.totalorder %s50, 7
      %p323 = por %p321, %p322
      %p324 = scmp.ne.s32.totalorder %s315, %s316
      %p325 = scmp.eq.s32.totalorder %s50, 0
      %p326 = por %p324, %p325
      %p327 = scmp.ne.s32.totalorder %s315, %s316
      %p328 = scmp.eq.s32.totalorder %s51, 7
      %p329 = por %p327, %p328
      %p331 = scmp.ne.s32.totalorder %s316, %s330
      %p332 = scmp.eq.s32.totalorder %s51, 0
      %p333 = por %p331, %p332
      %s335 = sadd.s32 %s334, 1
      %p338 = scmp.eq.s32.totalorder %s45, 7
      %p339 = scmp.ne.s32.totalorder %s334, %s336
      %p340 = scmp.eq.s32.totalorder %s45, 0
      %p341 = por %p339, %p340
      %p342 = scmp.ne.s32.totalorder %s334, %s336
      %p343 = scmp.eq.s32.totalorder %s50, 7
      %p344 = por %p342, %p343
      %p345 = scmp.ne.s32.totalorder %s336, %s337
      %p346 = scmp.eq.s32.totalorder %s50, 0
      %p347 = por %p345, %p346
      %p348 = scmp.ne.s32.totalorder %s336, %s337
      %p349 = scmp.eq.s32.totalorder %s51, 7
      %p350 = por %p348, %p349
      %p352 = scmp.ne.s32.totalorder %s337, %s351
      %p353 = scmp.eq.s32.totalorder %s51, 0
      %p354 = por %p352, %p353
      %s356 = sadd.s32 %s355, 1
      %p359 = scmp.eq.s32.totalorder %s45, 7
      %p360 = scmp.ne.s32.totalorder %s355, %s357
      %p361 = scmp.eq.s32.totalorder %s45, 0
      %p362 = por %p360, %p361
      %p363 = scmp.ne.s32.totalorder %s355, %s357
      %p364 = scmp.eq.s32.totalorder %s50, 7
      %p365 = por %p363, %p364
      %p366 = scmp.ne.s32.totalorder %s357, %s358
      %p367 = scmp.eq.s32.totalorder %s50, 0
      %p368 = por %p366, %p367
      %p369 = scmp.ne.s32.totalorder %s357, %s358
      %p370 = scmp.eq.s32.totalorder %s51, 7
      %p371 = por %p369, %p370
      %p373 = scmp.ne.s32.totalorder %s358, %s372
      %p374 = scmp.eq.s32.totalorder %s51, 0
      %p375 = por %p373, %p374
      %s376 = ssub.s32 %s52, %s71
      %p377 = scmp.eq.s32.totalorder %s376, 0
      %s379 = sadd.s32 %s378, 1
      %s380 = scalar_select %p377, %s378, %s379
      %p383 = pneg %p377
      %p384 = scmp.eq.s32.totalorder %s45, 7
      %p385 = por %p383, %p384
      %p386 = scmp.ne.s32.totalorder %s378, %s381
      %p387 = scmp.eq.s32.totalorder %s45, 0
      %p388 = por %p386, %p387
      %p389 = scmp.ne.s32.totalorder %s378, %s381
      %p390 = scmp.eq.s32.totalorder %s50, 7
      %p391 = por %p389, %p390
      %p392 = scmp.ne.s32.totalorder %s381, %s382
      %p393 = scmp.eq.s32.totalorder %s50, 0
      %p394 = por %p392, %p393
      %p395 = scmp.ne.s32.totalorder %s381, %s382
      %p396 = scmp.eq.s32.totalorder %s51, 7
      %p397 = por %p395, %p396
      %p399 = scmp.ne.s32.totalorder %s382, %s398
      %p400 = scmp.eq.s32.totalorder %s51, 0
      %p401 = por %p399, %p400
      %s402 = ssub.s32 %s52, %s71
      %p403 = scmp.eq.s32.totalorder %s402, 0
      %s405 = sadd.s32 %s404, 1
      %s406 = scalar_select %p403, %s404, %s405
      %p409 = pneg %p403
      %p410 = scmp.eq.s32.totalorder %s45, 7
      %p411 = por %p409, %p410
      %p412 = scmp.ne.s32.totalorder %s404, %s407
      %p413 = scmp.eq.s32.totalorder %s45, 0
      %p414 = por %p412, %p413
      %p415 = scmp.ne.s32.totalorder %s404, %s407
      %p416 = scmp.eq.s32.totalorder %s50, 7
      %p417 = por %p415, %p416
      %p418 = scmp.ne.s32.totalorder %s407, %s408
      %p419 = scmp.eq.s32.totalorder %s50, 0
      %p420 = por %p418, %p419
      %p421 = scmp.ne.s32.totalorder %s407, %s408
      %p422 = scmp.eq.s32.totalorder %s51, 7
      %p423 = por %p421, %p422
      %p425 = scmp.ne.s32.totalorder %s408, %s424
      %p426 = scmp.eq.s32.totalorder %s51, 0
      %p427 = por %p425, %p426
      %s428 = ssub.s32 %s52, %s71
      %p429 = scmp.eq.s32.totalorder %s428, 0
      %s431 = sadd.s32 %s430, 1
      %s432 = scalar_select %p429, %s430, %s431
      %p435 = pneg %p429
      %p436 = scmp.eq.s32.totalorder %s45, 7
      %p437 = por %p435, %p436
      %p438 = scmp.ne.s32.totalorder %s430, %s433
      %p439 = scmp.eq.s32.totalorder %s45, 0
      %p440 = por %p438, %p439
      %p441 = scmp.ne.s32.totalorder %s430, %s433
      %p442 = scmp.eq.s32.totalorder %s50, 7
      %p443 = por %p441, %p442
      %p444 = scmp.ne.s32.totalorder %s433, %s434
      %p445 = scmp.eq.s32.totalorder %s50, 0
      %p446 = por %p444, %p445
      %p447 = scmp.ne.s32.totalorder %s433, %s434
      %p448 = scmp.eq.s32.totalorder %s51, 7
      %p449 = por %p447, %p448
      %p451 = scmp.ne.s32.totalorder %s434, %s450
      %p452 = scmp.eq.s32.totalorder %s51, 0
      %p453 = por %p451, %p452
      %p454 = scmp.le.s32.totalorder 1, %s45
      %p455 = scmp.lt.s32.totalorder %s45, 9
      %p456 = pnand %p454, %p455
      %p457 = pneg %p456
      // Predicated region
      $region9: #{mlp_moe_forward.1} parent=5 // pred_check
        _
      $region10: #{mlp_moe_forward.1} parent=5 // pred_check_branch
        %459 = sbr.rel (%p456) target = $region12
      $region11: #{mlp_moe_forward.1} parent=5 // pred_region
        %s460 = ssub.s32 %s45, 1
        // Predicated region
        $region13: #{mlp_moe_forward.1} parent=11 // pred_check
          %p461 = pneg %p137
        $region14: #{mlp_moe_forward.1} parent=11 // pred_check_branch
          %463 = sbr.rel (%p461) target = $region16
        $region15: #{mlp_moe_forward.1} parent=11 // pred_region
          _
        $region16: #{mlp_moe_forward.1} parent=11 // pred_fallthru
          _
        // Predicated region
        $region17: #{mlp_moe_forward.1} parent=11 // pred_check
          %p464 = pneg %p158
        $region18: #{mlp_moe_forward.1} parent=11 // pred_check_branch
          %466 = sbr.rel (%p464) target = $region20
        $region19: #{mlp_moe_forward.1} parent=11 // pred_region
          _
        $region20: #{mlp_moe_forward.1} parent=11 // pred_fallthru
          _
        // Predicated region
        $region21: #{mlp_moe_forward.1} parent=11 // pred_check
          %p467 = pneg %p179
        $region22: #{mlp_moe_forward.1} parent=11 // pred_check_branch
          %469 = sbr.rel (%p467) target = $region24
        $region23: #{mlp_moe_forward.1} parent=11 // pred_region
          %s471 = ssub.s32 32768, 32768
          %472 = vsyncadd [#allocation11], %s471
          %s473 = sshll.u32 [#allocation10], 4
          %s474 = int_to_ptr.vmem [resolvable:$true] %s473
          %479 = dma.hbm_to_vmem [thread:$0]  %s7, 32768, %s474, [#allocation11], 256, 256, 16
        $region24: #{mlp_moe_forward.1} parent=11 // pred_fallthru
          _
        // Predicated region
        $region25: #{mlp_moe_forward.1} parent=11 // pred_check
          %p480 = pneg %p200
        $region26: #{mlp_moe_forward.1} parent=11 // pred_check_branch
          %482 = sbr.rel (%p480) target = $region28
        $region27: #{mlp_moe_forward.1} parent=11 // pred_region
          _
        $region28: #{mlp_moe_forward.1} parent=11 // pred_fallthru
          _
        // Predicated region
        $region29: #{mlp_moe_forward.1} parent=11 // pred_check
          %p483 = pneg %p221
        $region30: #{mlp_moe_forward.1} parent=11 // pred_check_branch
          %485 = sbr.rel (%p483) target = $region32
        $region31: #{mlp_moe_forward.1} parent=11 // pred_region
          %s487 = ssub.s32 6144, 6144
          %488 = vsyncadd [#allocation14], %s487
          %s489 = sshll.u32 [#allocation13], 4
          %s490 = int_to_ptr.vmem [resolvable:$true] %s489
          %495 = dma.hbm_to_vmem [thread:$0]  %s9, 6144, %s490, [#allocation14], 256, 256, 16
        $region32: #{mlp_moe_forward.1} parent=11 // pred_fallthru
          _
        // Predicated region
        $region33: #{mlp_moe_forward.1} parent=11 // pred_check
          %p496 = pneg %p242
        $region34: #{mlp_moe_forward.1} parent=11 // pred_check_branch
          %498 = sbr.rel (%p496) target = $region36
        $region35: #{mlp_moe_forward.1} parent=11 // pred_region
          _
        $region36: #{mlp_moe_forward.1} parent=11 // pred_fallthru
          _
        // Predicated region
        $region37: #{mlp_moe_forward.1} parent=11 // pred_check
          %p499 = pneg %p263
        $region38: #{mlp_moe_forward.1} parent=11 // pred_check_branch
          %501 = sbr.rel (%p499) target = $region40
        $region39: #{mlp_moe_forward.1} parent=11 // pred_region
          %s503 = ssub.s32 24576, 24576
          %504 = vsyncadd [#allocation14], %s503
          %s505 = sshll.u32 [#allocation15], 4
          %s506 = int_to_ptr.vmem [resolvable:$true] %s505
          %511 = dma.hbm_to_vmem [thread:$0]  %s11, 24576, %s506, [#allocation14], 256, 256, 16
        $region40: #{mlp_moe_forward.1} parent=11 // pred_fallthru
          _
        // Predicated region
        $region41: #{mlp_moe_forward.1} parent=11 // pred_check
          %p512 = pneg %p284
        $region42: #{mlp_moe_forward.1} parent=11 // pred_check_branch
          %514 = sbr.rel (%p512) target = $region44
        $region43: #{mlp_moe_forward.1} parent=11 // pred_region
          _
        $region44: #{mlp_moe_forward.1} parent=11 // pred_fallthru
          _
        // Predicated region
        $region45: #{mlp_moe_forward.1} parent=11 // pred_check
          %p515 = pneg %p305
        $region46: #{mlp_moe_forward.1} parent=11 // pred_check_branch
          %517 = sbr.rel (%p515) target = $region48
        $region47: #{mlp_moe_forward.1} parent=11 // pred_region
          _
        $region48: #{mlp_moe_forward.1} parent=11 // pred_fallthru
          _
        // Predicated region
        $region49: #{mlp_moe_forward.1} parent=11 // pred_check
          %p518 = pneg %p326
        $region50: #{mlp_moe_forward.1} parent=11 // pred_check_branch
          %520 = sbr.rel (%p518) target = $region52
        $region51: #{mlp_moe_forward.1} parent=11 // pred_region
          _
        $region52: #{mlp_moe_forward.1} parent=11 // pred_fallthru
          _
        // Predicated region
        $region53: #{mlp_moe_forward.1} parent=11 // pred_check
          %p521 = pneg %p347
        $region54: #{mlp_moe_forward.1} parent=11 // pred_check_branch
          %523 = sbr.rel (%p521) target = $region56
        $region55: #{mlp_moe_forward.1} parent=11 // pred_region
          _
        $region56: #{mlp_moe_forward.1} parent=11 // pred_fallthru
          _
        // Predicated region
        $region57: #{mlp_moe_forward.1} parent=11 // pred_check
          %p524 = pneg %p368
        $region58: #{mlp_moe_forward.1} parent=11 // pred_check_branch
          %526 = sbr.rel (%p524) target = $region60
        $region59: #{mlp_moe_forward.1} parent=11 // pred_region
          _
        $region60: #{mlp_moe_forward.1} parent=11 // pred_fallthru
          _
      $region12: #{mlp_moe_forward.1} parent=5 // pred_fallthru
        _
      %p527 = scmp.lt.s32.totalorder %s45, 8
      // Predicated region
      $region61: #{mlp_moe_forward.1} parent=5 // pred_check
        %p528 = pneg %p527
      $region62: #{mlp_moe_forward.1} parent=5 // pred_check_branch
        %530 = sbr.rel (%p528) target = $region64
      $region63: #{mlp_moe_forward.1} parent=5 // pred_region
        // Predicated region
        $region65: #{mlp_moe_forward.1} parent=63 // pred_check
          %p531 = pneg %p84
        $region66: #{mlp_moe_forward.1} parent=63 // pred_check_branch
          %533 = sbr.rel (%p531) target = $region68
        $region67: #{mlp_moe_forward.1} parent=63 // pred_region
          %s534 = smul.u32 2, %s52
          %p535 = scmp.lt.s32.totalorder %s534, 3
          %s536 = scalar_select %p535, %s534, 3
          %s537 = smul.addr %s536, 8
          %s538 = scalar_lea.vmem %s3, %s537
          %s539 = smul.u32 2, %s52
        $region68: #{mlp_moe_forward.1} parent=63 // pred_fallthru
          _
        // Predicated region
        $region69: #{mlp_moe_forward.1} parent=63 // pred_check
          %p540 = pneg %p110
        $region70: #{mlp_moe_forward.1} parent=63 // pred_check_branch
          %542 = sbr.rel (%p540) target = $region72
        $region71: #{mlp_moe_forward.1} parent=63 // pred_region
          %s543 = smul.u32 2, %s52
          %p544 = scmp.lt.s32.totalorder %s543, 3
          %s545 = scalar_select %p544, %s543, 3
          %s546 = smul.addr %s545, 8
          %s547 = scalar_lea.vmem %s4, %s546
          %s548 = smul.u32 2, %s52
        $region72: #{mlp_moe_forward.1} parent=63 // pred_fallthru
          _
      $region64: #{mlp_moe_forward.1} parent=5 // pred_fallthru
        _
      %p549 = scmp.le.s32.totalorder 1, %s45
      %p550 = scmp.lt.s32.totalorder %s45, 9
      %p551 = pnand %p549, %p550
      %p552 = pneg %p551
      // Predicated region
      $region73: #{mlp_moe_forward.1} parent=5 // pred_check
        _
      $region74: #{mlp_moe_forward.1} parent=5 // pred_check_branch
        %554 = sbr.rel (%p551) target = $region76
      $region75: #{mlp_moe_forward.1} parent=5 // pred_region
        %s555 = ssub.s32 %s45, 1
        // Predicated region
        $region77: #{mlp_moe_forward.1} parent=75 // pred_check
          %p556 = pneg %p179
        $region78: #{mlp_moe_forward.1} parent=75 // pred_check_branch
          %558 = sbr.rel (%p556) target = $region80
        $region79: #{mlp_moe_forward.1} parent=75 // pred_region
          %559 = dma.done [#allocation11], 32768
        $region80: #{mlp_moe_forward.1} parent=75 // pred_fallthru
          _
        // Predicated region
        $region81: #{mlp_moe_forward.1} parent=75 // pred_check
          %p560 = pneg %p221
        $region82: #{mlp_moe_forward.1} parent=75 // pred_check_branch
          %562 = sbr.rel (%p560) target = $region84
        $region83: #{mlp_moe_forward.1} parent=75 // pred_region
          %563 = dma.done [#allocation14], 6144
        $region84: #{mlp_moe_forward.1} parent=75 // pred_fallthru
          _
        // Predicated region
        $region85: #{mlp_moe_forward.1} parent=75 // pred_check
          %p564 = pneg %p263
        $region86: #{mlp_moe_forward.1} parent=75 // pred_check_branch
          %566 = sbr.rel (%p564) target = $region88
        $region87: #{mlp_moe_forward.1} parent=75 // pred_region
          %567 = dma.done [#allocation14], 24576
        $region88: #{mlp_moe_forward.1} parent=75 // pred_fallthru
          _
        %s568 = smul.u32 2, %s55
        %p569 = scmp.lt.s32.totalorder %s568, 3
        %s570 = scalar_select %p569, %s568, 3
        %s571 = smul.addr %s570, 8
        %s572 = scalar_lea.vmem %s3, %s571
        %p573 = pneg %p90
        %p574 = pneg %p87
        %s575 = smul.u32 2, %s55
        %p576 = scmp.lt.s32.totalorder %s575, 3
        %s577 = scalar_select %p576, %s575, 3
        %s578 = smul.addr %s577, 8
        %s579 = scalar_lea.vmem %s4, %s578
        %p580 = pneg %p116
        %p581 = pneg %p113
        %p582 = pneg %p137
        %p583 = pneg %p134
        %p584 = pneg %p158
        %p585 = pneg %p155
        %p586 = pneg %p179
        %p587 = pneg %p176
        %p588 = pneg %p200
        %p589 = pneg %p197
        %p590 = pneg %p221
        %p591 = pneg %p218
        %p592 = pneg %p242
        %p593 = pneg %p239
        %p594 = pneg %p263
        %p595 = pneg %p260
        %p596 = pneg %p284
        %p597 = pneg %p281
        %p598 = pneg %p305
        %p599 = pneg %p302
        %p600 = pneg %p326
        %p601 = pneg %p323
        %p602 = pneg %p347
        %p603 = pneg %p344
        %p604 = pneg %p368
        %p605 = pneg %p365
        %p606 = pneg %p394
        %p607 = pneg %p391
        %s608 = sand.u32 %s381, 1
        %s609 = scalar_lea.sflag [#allocation12], %s608
        %s610 = sand.u32 %s381, 1
        %s611 = smul.addr %s610, 32
        %s612 = scalar_lea.vmem [#allocation16], %s611
        %p613 = pneg %p420
        %p614 = pneg %p417
        %s615 = smul.u32 2, %s55
        %p616 = scmp.lt.s32.totalorder %s615, 3
        %s617 = scalar_select %p616, %s615, 3
        %s618 = smul.addr %s617, 2
        %s619 = smul.addr %s618, 8
        %s620 = scalar_lea.vmem %s18, %s619
        %p621 = pneg %p446
        %p622 = pneg %p443
        %s623 = smul.u32 2, %s55
        %p624 = scmp.lt.s32.totalorder %s623, 3
        %s625 = scalar_select %p624, %s623, 3
        %s626 = smul.addr %s625, 2
        %s627 = smul.addr %s626, 8
        %s628 = scalar_lea.vmem %s19, %s627
        %s629 = smul.u32 2, %s55
        %p630 = scmp.lt.s32.totalorder %s629, 3
        %s631 = scalar_select %p630, %s629, 3
        %s632 = smul.addr %s631, 8
        %s633 = scalar_lea.vmem %s3, %s632
        %s634 = smul.u32 2, %s55
        %s635 = smul.u32 2, %s55
        %p636 = scmp.lt.s32.totalorder %s635, 3
        %s637 = scalar_select %p636, %s635, 3
        %s638 = smul.addr %s637, 8
        %s639 = scalar_lea.vmem %s4, %s638
        %s640 = smul.u32 2, %s55
        %s641 = smul.u32 2, %s55
        %s642 = smul.u32 2, %s55
        %p643 = scmp.lt.s32.totalorder %s642, 3
        %s644 = scalar_select %p643, %s642, 3
        %s645 = smul.addr %s644, 2
        %s646 = smul.addr %s645, 8
        %s647 = scalar_lea.vmem %s18, %s646
        %s648 = smul.u32 2, %s55
        %s649 = smul.u32 2, %s55
        %p650 = scmp.lt.s32.totalorder %s649, 3
        %s651 = scalar_select %p650, %s649, 3
        %s652 = smul.addr %s651, 2
        %s653 = smul.addr %s652, 8
        %s654 = scalar_lea.vmem %s19, %s653
        %s655 = smul.u32 2, %s55
        %s656 = smul.u32 %s55, 4
        %s657 = sadd.s32 %s656, %s56
        %s658 = sld [smem:[#allocation7 + %s657]]
        %s659 = sld [smem:[#allocation9 + %s55]]
        %p660 = scmp.lt.s32.totalorder %s56, %s659
        %s661 = ssub.s32 %s658, 1
        %p662 = scmp.gt.s32.totalorder %s661, 0
        %s663 = scalar_select %p662, %s661, 0
        %p664 = scmp.eq.s32.totalorder %s57, 0
        %p665 = scmp.eq.s32.totalorder %s56, 0
        %p666 = pnand %p664, %p665
        %p667 = pneg %p666
        // Predicated region
        $region89: #{mlp_moe_forward.1} parent=75 // pred_check
          _
        $region90: #{mlp_moe_forward.1} parent=75 // pred_check_branch
          %669 = sbr.rel (%p666) target = $region92
        $region91: #{mlp_moe_forward.1} parent=75 // pred_region
          %670 = vst [vmem:[#allocation5] sm:$0xff] 0.0
          %671 = vst [vmem:[#allocation5 + $0x8] sm:$0xff] 0.0
          %672 = vst [vmem:[#allocation5 + $0x10] sm:$0xff] 0.0
          %673 = vst [vmem:[#allocation5 + $0x18] sm:$0xff] 0.0
          %v674 = vld [vmem:[%s633] sm:$0xff]
          %v675 = vld [vmem:[%s633 + $0x8] sm:$0xff]
          %v676 = vld [vmem:[%s13] sm:$0xff]
          %v677 = vld [vmem:[%s13 + $0x8] sm:$0xff]
          %v678 = vld [vmem:[%s13 + $0x10] sm:$0xff]
          %v679 = vld [vmem:[%s13 + $0x18] sm:$0xff]
          %v680 = vld [vmem:[%s13 + $0x20] sm:$0xff]
          %v681 = vld [vmem:[%s13 + $0x28] sm:$0xff]
          %v682 = vld [vmem:[%s13 + $0x30] sm:$0xff]
          %v683 = vld [vmem:[%s13 + $0x38] sm:$0xff]
          %v684 = vld [vmem:[%s13 + $0x40] sm:$0xff]
          %v685 = vld [vmem:[%s13 + $0x48] sm:$0xff]
          %v686 = vld [vmem:[%s13 + $0x50] sm:$0xff]
          %v687 = vld [vmem:[%s13 + $0x58] sm:$0xff]
          %v688 = vld [vmem:[%s13 + $0x60] sm:$0xff]
          %v689 = vld [vmem:[%s13 + $0x68] sm:$0xff]
          %v690 = vld [vmem:[%s13 + $0x70] sm:$0xff]
          %v691 = vld [vmem:[%s13 + $0x78] sm:$0xff]
          %v692 = vld [vmem:[%s14] sm:$0x3]
          %v694 = vlaneseq
          %v695 = vshrl.u32 %v694, 7
          %v696 = vsub.s32 0, %v695
          %v697 = vrot.slane %v692, %v696
          %v698 = vlaneseq
          %v699 = vshrl.u32 %v698, 7
          %v700 = vsub.s32 1, %v699
          %v701 = vrot.slane %v692, %v700
          %vm704 = vcmask 523264
          %v706 = vsel %vm704, %v674, 0
          %v709 = vsel %vm704, %v675, 0
          %711 = vmatprep.subr.mxu0 0.0
          %712 = vmatpush1.msra.mxu0 0.0
          %713 = vmatprep.subr.mxu0 0.0
          %714 = vmatpush1.msra.mxu0 0.0
          %715 = vmatprep.subr.mxu0 0.0
          %716 = vmatpush1.msra.mxu0 0.0
          %717 = vmatprep.subr.mxu0 0.0
          %718 = vmatpush1.msra.mxu0 0.0
          %719 = vmatprep.subr.mxu0 0.0
          %720 = vmatpush1.msra.mxu0 0.0
          %721 = vmatprep.subr.mxu0 0.0
          %722 = vmatpush1.msra.mxu0 0.0
          %723 = vmatprep.subr.mxu0 0.0
          %724 = vmatpush1.msra.mxu0 0.0
          %725 = vmatprep.subr.mxu0 0.0
          %726 = vmatpush1.msra.mxu0 0.0
          %727 = vmatprep.subr.mxu0 %v691
          %728 = vmatpush1.msra.mxu0 %v690
          %729 = vmatprep.subr.mxu0 %v689
          %730 = vmatpush1.msra.mxu0 %v688
          %731 = vmatprep.subr.mxu0 %v687
          %732 = vmatpush1.msra.mxu0 %v686
          %733 = vmatprep.subr.mxu0 %v685
          %734 = vmatpush1.msra.mxu0 %v684
          %735 = vmatprep.subr.mxu0 %v683
          %736 = vmatpush1.msra.mxu0 %v682
          %737 = vmatprep.subr.mxu0 %v681
          %738 = vmatpush1.msra.mxu0 %v680
          %739 = vmatprep.subr.mxu0 %v679
          %740 = vmatpush1.msra.mxu0 %v678
          %741 = vmatprep.subr.mxu0 %v677
          %742 = vmatpush1.msra.mxu0 %v676
          %743 = vmatprep.subr.mxu0 0.0
          %744 = vmatpush2.msra.mxu0 0.0
          %745 = vmatprep.subr.mxu0 0.0
          %746 = vmatpush2.msra.mxu0 0.0
          %747 = vmatprep.subr.mxu0 0.0
          %748 = vmatpush2.msra.mxu0 0.0
          %749 = vmatprep.subr.mxu0 0.0
          %750 = vmatpush2.msra.mxu0 0.0
          %751 = vmatprep.subr.mxu0 0.0
          %752 = vmatpush2.msra.mxu0 0.0
          %753 = vmatprep.subr.mxu0 0.0
          %754 = vmatpush2.msra.mxu0 0.0
          %755 = vmatprep.subr.mxu0 0.0
          %756 = vmatpush2.msra.mxu0 0.0
          %757 = vmatprep.subr.mxu0 0.0
          %758 = vmatpush2.msra.mxu0 0.0
          %759 = vmatprep.subr.mxu0 0.0
          %760 = vmatpush2.msra.mxu0 0.0
          %761 = vmatprep.subr.mxu0 0.0
          %762 = vmatpush2.msra.mxu0 0.0
          %763 = vmatprep.subr.mxu0 0.0
          %764 = vmatpush2.msra.mxu0 0.0
          %765 = vmatprep.subr.mxu0 0.0
          %766 = vmatpush2.msra.mxu0 0.0
          %767 = vmatprep.subr.mxu0 0.0
          %768 = vmatpush2.msra.mxu0 0.0
          %769 = vmatprep.subr.mxu0 0.0
          %770 = vmatpush2.msra.mxu0 0.0
          %771 = vmatprep.subr.mxu0 0.0
          %772 = vmatpush2.msra.mxu0 0.0
          %773 = vmatprep.subr.mxu0 0.0
          %774 = vmatpush2.msra.mxu0 0.0
          %775 = vmatprep.mubr.f32.mxu0 0.0
          %776 = vmatmul.mubr.f32.gmra.mxu0 %v706
          %v777 = vpop.f32.mrf.mxu0
          %v778 = vadd.f32 %v697, %v777
          %v779 = vpop.f32.mrf.mxu0
          %v780 = vadd.f32 %v701, %v779
          %781 = vmatprep.mubr.f32.mxu0 0.0
          %782 = vmatmul.mubr.f32.gmra.mxu0 %v709
          %v783 = vpop.f32.mrf.mxu0
          %v784 = vadd.f32 %v697, %v783
          %v785 = vpop.f32.mrf.mxu0
          %v786 = vadd.f32 %v701, %v785
          %787 = vdwg.mxu0
          %v788 = vmul.f32 %v778, 0.5
          %v789 = vmul.f32 %v780, 0.5
          %v790 = vmul.f32 %v784, 0.5
          %v791 = vmul.f32 %v786, 0.5
          %v792 = vmul.f32 %v778, 0.70710677
          %v793 = vmul.f32 %v780, 0.70710677
          %v794 = vmul.f32 %v784, 0.70710677
          %v795 = vmul.f32 %v786, 0.70710677
          %v796 = verf.f32.pop %v792
          %v797 = verf.f32.pop %v793
          %v798 = verf.f32.pop %v794
          %v799 = verf.f32.pop %v795
          %v800 = vadd.f32 %v796, 1.0
          %v801 = vadd.f32 %v797, 1.0
          %v802 = vadd.f32 %v798, 1.0
          %v803 = vadd.f32 %v799, 1.0
          %v804 = vmul.f32 %v788, %v800
          %v805 = vmul.f32 %v789, %v801
          %v806 = vmul.f32 %v790, %v802
          %v807 = vmul.f32 %v791, %v803
          %808 = vst [vmem:[#allocation2] sm:$0xff] %v804
          %809 = vst [vmem:[#allocation2 + $0x8] sm:$0xff] %v805
          %810 = vst [vmem:[#allocation2 + $0x10] sm:$0xff] %v806
          %811 = vst [vmem:[#allocation2 + $0x18] sm:$0xff] %v807
          %s812 = smul.u32 %s658, 16
          %s813 = smul.addr %s812, 8
          %s814 = scalar_lea.vmem %s5, %s813
          %v815 = vld [vmem:[%s814] sm:$0xff]
          %v816 = vld [vmem:[%s814 + $0x8] sm:$0xff]
          %v817 = vld [vmem:[%s814 + $0x10] sm:$0xff]
          %v818 = vld [vmem:[%s814 + $0x18] sm:$0xff]
          %v819 = vld [vmem:[%s814 + $0x20] sm:$0xff]
          %v820 = vld [vmem:[%s814 + $0x28] sm:$0xff]
          %v821 = vld [vmem:[%s814 + $0x30] sm:$0xff]
          %v822 = vld [vmem:[%s814 + $0x38] sm:$0xff]
          %v823 = vld [vmem:[%s814 + $0x40] sm:$0xff]
          %v824 = vld [vmem:[%s814 + $0x48] sm:$0xff]
          %v825 = vld [vmem:[%s814 + $0x50] sm:$0xff]
          %v826 = vld [vmem:[%s814 + $0x58] sm:$0xff]
          %v827 = vld [vmem:[%s814 + $0x60] sm:$0xff]
          %v828 = vld [vmem:[%s814 + $0x68] sm:$0xff]
          %v829 = vld [vmem:[%s814 + $0x70] sm:$0xff]
          %v830 = vld [vmem:[%s814 + $0x78] sm:$0xff]
          %s831 = smul.u32 %s658, 2
          %s832 = scalar_lea.vmem %s6, %s831
          %v833 = vld [vmem:[%s832] sm:$0x3]
          %v835 = vlaneseq
          %v836 = vshrl.u32 %v835, 7
          %v837 = vsub.s32 0, %v836
          %v838 = vrot.slane %v833, %v837
          %v839 = vlaneseq
          %v840 = vshrl.u32 %v839, 7
          %v841 = vsub.s32 1, %v840
          %v842 = vrot.slane %v833, %v841
          %845 = vmatprep.subr.mxu0 0.0
          %846 = vmatpush1.msra.mxu0 0.0
          %847 = vmatprep.subr.mxu0 0.0
          %848 = vmatpush1.msra.mxu0 0.0
          %849 = vmatprep.subr.mxu0 0.0
          %850 = vmatpush1.msra.mxu0 0.0
          %851 = vmatprep.subr.mxu0 0.0
          %852 = vmatpush1.msra.mxu0 0.0
          %853 = vmatprep.subr.mxu0 0.0
          %854 = vmatpush1.msra.mxu0 0.0
          %855 = vmatprep.subr.mxu0 0.0
          %856 = vmatpush1.msra.mxu0 0.0
          %857 = vmatprep.subr.mxu0 0.0
          %858 = vmatpush1.msra.mxu0 0.0
          %859 = vmatprep.subr.mxu0 0.0
          %860 = vmatpush1.msra.mxu0 0.0
          %861 = vmatprep.subr.mxu0 %v830
          %862 = vmatpush1.msra.mxu0 %v829
          %863 = vmatprep.subr.mxu0 %v828
          %864 = vmatpush1.msra.mxu0 %v827
          %865 = vmatprep.subr.mxu0 %v826
          %866 = vmatpush1.msra.mxu0 %v825
          %867 = vmatprep.subr.mxu0 %v824
          %868 = vmatpush1.msra.mxu0 %v823
          %869 = vmatprep.subr.mxu0 %v822
          %870 = vmatpush1.msra.mxu0 %v821
          %871 = vmatprep.subr.mxu0 %v820
          %872 = vmatpush1.msra.mxu0 %v819
          %873 = vmatprep.subr.mxu0 %v818
          %874 = vmatpush1.msra.mxu0 %v817
          %875 = vmatprep.subr.mxu0 %v816
          %876 = vmatpush1.msra.mxu0 %v815
          %877 = vmatprep.subr.mxu0 0.0
          %878 = vmatpush2.msra.mxu0 0.0
          %879 = vmatprep.subr.mxu0 0.0
          %880 = vmatpush2.msra.mxu0 0.0
          %881 = vmatprep.subr.mxu0 0.0
          %882 = vmatpush2.msra.mxu0 0.0
          %883 = vmatprep.subr.mxu0 0.0
          %884 = vmatpush2.msra.mxu0 0.0
          %885 = vmatprep.subr.mxu0 0.0
          %886 = vmatpush2.msra.mxu0 0.0
          %887 = vmatprep.subr.mxu0 0.0
          %888 = vmatpush2.msra.mxu0 0.0
          %889 = vmatprep.subr.mxu0 0.0
          %890 = vmatpush2.msra.mxu0 0.0
          %891 = vmatprep.subr.mxu0 0.0
          %892 = vmatpush2.msra.mxu0 0.0
          %893 = vmatprep.subr.mxu0 0.0
          %894 = vmatpush2.msra.mxu0 0.0
          %895 = vmatprep.subr.mxu0 0.0
          %896 = vmatpush2.msra.mxu0 0.0
          %897 = vmatprep.subr.mxu0 0.0
          %898 = vmatpush2.msra.mxu0 0.0
          %899 = vmatprep.subr.mxu0 0.0
          %900 = vmatpush2.msra.mxu0 0.0
          %901 = vmatprep.subr.mxu0 0.0
          %902 = vmatpush2.msra.mxu0 0.0
          %903 = vmatprep.subr.mxu0 0.0
          %904 = vmatpush2.msra.mxu0 0.0
          %905 = vmatprep.subr.mxu0 0.0
          %906 = vmatpush2.msra.mxu0 0.0
          %907 = vmatprep.subr.mxu0 0.0
          %908 = vmatpush2.msra.mxu0 0.0
          %909 = vmatprep.mubr.f32.mxu0 0.0
          %910 = vmatmul.mubr.f32.gmra.mxu0 %v706
          %v911 = vpop.f32.mrf.mxu0
          %v912 = vadd.f32 %v838, %v911
          %v913 = vpop.f32.mrf.mxu0
          %v914 = vadd.f32 %v842, %v913
          %915 = vmatprep.mubr.f32.mxu0 0.0
          %916 = vmatmul.mubr.f32.gmra.mxu0 %v709
          %v917 = vpop.f32.mrf.mxu0
          %v918 = vadd.f32 %v838, %v917
          %v919 = vpop.f32.mrf.mxu0
          %v920 = vadd.f32 %v842, %v919
          %921 = vdwg.mxu0
          %v922 = vmul.f32 %v912, 0.5
          %v923 = vmul.f32 %v914, 0.5
          %v924 = vmul.f32 %v918, 0.5
          %v925 = vmul.f32 %v920, 0.5
          %v926 = vmul.f32 %v912, 0.70710677
          %v927 = vmul.f32 %v914, 0.70710677
          %v928 = vmul.f32 %v918, 0.70710677
          %v929 = vmul.f32 %v920, 0.70710677
          %v930 = verf.f32.pop %v926
          %v931 = verf.f32.pop %v927
          %v932 = verf.f32.pop %v928
          %v933 = verf.f32.pop %v929
          %v934 = vadd.f32 %v930, 1.0
          %v935 = vadd.f32 %v931, 1.0
          %v936 = vadd.f32 %v932, 1.0
          %v937 = vadd.f32 %v933, 1.0
          %v938 = vmul.f32 %v922, %v934
          %v939 = vmul.f32 %v923, %v935
          %v940 = vmul.f32 %v924, %v936
          %v941 = vmul.f32 %v925, %v937
          %942 = vst [vmem:[#allocation3] sm:$0xff] %v938
          %943 = vst [vmem:[#allocation3 + $0x8] sm:$0xff] %v939
          %944 = vst [vmem:[#allocation3 + $0x10] sm:$0xff] %v940
          %945 = vst [vmem:[#allocation3 + $0x18] sm:$0xff] %v941
        $region92: #{mlp_moe_forward.1} parent=75 // pred_fallthru
          _
        %p946 = scmp.gt.s32.totalorder %s56, 0
        %p947 = pnand %p946, %p660
        %p948 = pneg %p947
        %p949 = pnand %p664, %p948
        %p950 = pneg %p949
        // Predicated region
        $region93: #{mlp_moe_forward.1} parent=75 // pred_check
          _
        $region94: #{mlp_moe_forward.1} parent=75 // pred_check_branch
          %952 = sbr.rel (%p949) target = $region96
        $region95: #{mlp_moe_forward.1} parent=75 // pred_region
          %v953 = vld [vmem:[%s633] sm:$0xff]
          %v954 = vld [vmem:[%s633 + $0x8] sm:$0xff]
          %s955 = smul.u32 %s658, 16
          %s956 = smul.addr %s955, 8
          %s957 = scalar_lea.vmem %s5, %s956
          %v958 = vld [vmem:[%s957] sm:$0xff]
          %v959 = vld [vmem:[%s957 + $0x8] sm:$0xff]
          %v960 = vld [vmem:[%s957 + $0x10] sm:$0xff]
          %v961 = vld [vmem:[%s957 + $0x18] sm:$0xff]
          %v962 = vld [vmem:[%s957 + $0x20] sm:$0xff]
          %v963 = vld [vmem:[%s957 + $0x28] sm:$0xff]
          %v964 = vld [vmem:[%s957 + $0x30] sm:$0xff]
          %v965 = vld [vmem:[%s957 + $0x38] sm:$0xff]
          %v966 = vld [vmem:[%s957 + $0x40] sm:$0xff]
          %v967 = vld [vmem:[%s957 + $0x48] sm:$0xff]
          %v968 = vld [vmem:[%s957 + $0x50] sm:$0xff]
          %v969 = vld [vmem:[%s957 + $0x58] sm:$0xff]
          %v970 = vld [vmem:[%s957 + $0x60] sm:$0xff]
          %v971 = vld [vmem:[%s957 + $0x68] sm:$0xff]
          %v972 = vld [vmem:[%s957 + $0x70] sm:$0xff]
          %v973 = vld [vmem:[%s957 + $0x78] sm:$0xff]
          %s974 = smul.u32 %s658, 2
          %s975 = scalar_lea.vmem %s6, %s974
          %v976 = vld [vmem:[%s975] sm:$0x3]
          %v978 = vlaneseq
          %v979 = vshrl.u32 %v978, 7
          %v980 = vsub.s32 0, %v979
          %v981 = vrot.slane %v976, %v980
          %v982 = vlaneseq
          %v983 = vshrl.u32 %v982, 7
          %v984 = vsub.s32 1, %v983
          %v985 = vrot.slane %v976, %v984
          %vm988 = vcmask 523264
          %v990 = vsel %vm988, %v953, 0
          %v993 = vsel %vm988, %v954, 0
          %995 = vmatprep.subr.mxu0 0.0
          %996 = vmatpush1.msra.mxu0 0.0
          %997 = vmatprep.subr.mxu0 0.0
          %998 = vmatpush1.msra.mxu0 0.0
          %999 = vmatprep.subr.mxu0 0.0
          %1000 = vmatpush1.msra.mxu0 0.0
          %1001 = vmatprep.subr.mxu0 0.0
          %1002 = vmatpush1.msra.mxu0 0.0
          %1003 = vmatprep.subr.mxu0 0.0
          %1004 = vmatpush1.msra.mxu0 0.0
          %1005 = vmatprep.subr.mxu0 0.0
          %1006 = vmatpush1.msra.mxu0 0.0
          %1007 = vmatprep.subr.mxu0 0.0
          %1008 = vmatpush1.msra.mxu0 0.0
          %1009 = vmatprep.subr.mxu0 0.0
          %1010 = vmatpush1.msra.mxu0 0.0
          %1011 = vmatprep.subr.mxu0 %v973
          %1012 = vmatpush1.msra.mxu0 %v972
          %1013 = vmatprep.subr.mxu0 %v971
          %1014 = vmatpush1.msra.mxu0 %v970
          %1015 = vmatprep.subr.mxu0 %v969
          %1016 = vmatpush1.msra.mxu0 %v968
          %1017 = vmatprep.subr.mxu0 %v967
          %1018 = vmatpush1.msra.mxu0 %v966
          %1019 = vmatprep.subr.mxu0 %v965
          %1020 = vmatpush1.msra.mxu0 %v964
          %1021 = vmatprep.subr.mxu0 %v963
          %1022 = vmatpush1.msra.mxu0 %v962
          %1023 = vmatprep.subr.mxu0 %v961
          %1024 = vmatpush1.msra.mxu0 %v960
          %1025 = vmatprep.subr.mxu0 %v959
          %1026 = vmatpush1.msra.mxu0 %v958
          %1027 = vmatprep.subr.mxu0 0.0
          %1028 = vmatpush2.msra.mxu0 0.0
          %1029 = vmatprep.subr.mxu0 0.0
          %1030 = vmatpush2.msra.mxu0 0.0
          %1031 = vmatprep.subr.mxu0 0.0
          %1032 = vmatpush2.msra.mxu0 0.0
          %1033 = vmatprep.subr.mxu0 0.0
          %1034 = vmatpush2.msra.mxu0 0.0
          %1035 = vmatprep.subr.mxu0 0.0
          %1036 = vmatpush2.msra.mxu0 0.0
          %1037 = vmatprep.subr.mxu0 0.0
          %1038 = vmatpush2.msra.mxu0 0.0
          %1039 = vmatprep.subr.mxu0 0.0
          %1040 = vmatpush2.msra.mxu0 0.0
          %1041 = vmatprep.subr.mxu0 0.0
          %1042 = vmatpush2.msra.mxu0 0.0
          %1043 = vmatprep.subr.mxu0 0.0
          %1044 = vmatpush2.msra.mxu0 0.0
          %1045 = vmatprep.subr.mxu0 0.0
          %1046 = vmatpush2.msra.mxu0 0.0
          %1047 = vmatprep.subr.mxu0 0.0
          %1048 = vmatpush2.msra.mxu0 0.0
          %1049 = vmatprep.subr.mxu0 0.0
          %1050 = vmatpush2.msra.mxu0 0.0
          %1051 = vmatprep.subr.mxu0 0.0
          %1052 = vmatpush2.msra.mxu0 0.0
          %1053 = vmatprep.subr.mxu0 0.0
          %1054 = vmatpush2.msra.mxu0 0.0
          %1055 = vmatprep.subr.mxu0 0.0
          %1056 = vmatpush2.msra.mxu0 0.0
          %1057 = vmatprep.subr.mxu0 0.0
          %1058 = vmatpush2.msra.mxu0 0.0
          %1059 = vmatprep.mubr.f32.mxu0 0.0
          %1060 = vmatmul.mubr.f32.gmra.mxu0 %v990
          %v1061 = vpop.f32.mrf.mxu0
          %v1062 = vadd.f32 %v981, %v1061
          %v1063 = vpop.f32.mrf.mxu0
          %v1064 = vadd.f32 %v985, %v1063
          %1065 = vmatprep.mubr.f32.mxu0 0.0
          %1066 = vmatmul.mubr.f32.gmra.mxu0 %v993
          %v1067 = vpop.f32.mrf.mxu0
          %v1068 = vadd.f32 %v981, %v1067
          %v1069 = vpop.f32.mrf.mxu0
          %v1070 = vadd.f32 %v985, %v1069
          %1071 = vdwg.mxu0
          %v1072 = vmul.f32 %v1062, 0.5
          %v1073 = vmul.f32 %v1064, 0.5
          %v1074 = vmul.f32 %v1068, 0.5
          %v1075 = vmul.f32 %v1070, 0.5
          %v1076 = vmul.f32 %v1062, 0.70710677
          %v1077 = vmul.f32 %v1064, 0.70710677
          %v1078 = vmul.f32 %v1068, 0.70710677
          %v1079 = vmul.f32 %v1070, 0.70710677
          %v1080 = verf.f32.pop %v1076
          %v1081 = verf.f32.pop %v1077
          %v1082 = verf.f32.pop %v1078
          %v1083 = verf.f32.pop %v1079
          %v1084 = vadd.f32 %v1080, 1.0
          %v1085 = vadd.f32 %v1081, 1.0
          %v1086 = vadd.f32 %v1082, 1.0
          %v1087 = vadd.f32 %v1083, 1.0
          %v1088 = vmul.f32 %v1072, %v1084
          %v1089 = vmul.f32 %v1073, %v1085
          %v1090 = vmul.f32 %v1074, %v1086
          %v1091 = vmul.f32 %v1075, %v1087
          %1092 = vst [vmem:[#allocation3] sm:$0xff] %v1088
          %1093 = vst [vmem:[#allocation3 + $0x8] sm:$0xff] %v1089
          %1094 = vst [vmem:[#allocation3 + $0x10] sm:$0xff] %v1090
          %1095 = vst [vmem:[#allocation3 + $0x18] sm:$0xff] %v1091
          %s1096 = smul.u32 %s663, 16
          %s1097 = smul.addr %s1096, 8
          %s1098 = scalar_lea.vmem [#allocation13], %s1097
          %v1099 = vld [vmem:[%s1098] sm:$0xff]
          %v1100 = vld [vmem:[%s1098 + $0x8] sm:$0xff]
          %v1101 = vld [vmem:[%s1098 + $0x10] sm:$0xff]
          %v1102 = vld [vmem:[%s1098 + $0x18] sm:$0xff]
          %v1103 = vld [vmem:[%s1098 + $0x20] sm:$0xff]
          %v1104 = vld [vmem:[%s1098 + $0x28] sm:$0xff]
          %v1105 = vld [vmem:[%s1098 + $0x30] sm:$0xff]
          %v1106 = vld [vmem:[%s1098 + $0x38] sm:$0xff]
          %v1107 = vld [vmem:[%s1098 + $0x40] sm:$0xff]
          %v1108 = vld [vmem:[%s1098 + $0x48] sm:$0xff]
          %v1109 = vld [vmem:[%s1098 + $0x50] sm:$0xff]
          %v1110 = vld [vmem:[%s1098 + $0x58] sm:$0xff]
          %v1111 = vld [vmem:[%s1098 + $0x60] sm:$0xff]
          %v1112 = vld [vmem:[%s1098 + $0x68] sm:$0xff]
          %v1113 = vld [vmem:[%s1098 + $0x70] sm:$0xff]
          %v1114 = vld [vmem:[%s1098 + $0x78] sm:$0xff]
          %s1115 = smul.u32 %s663, 2
          %s1116 = scalar_lea.vmem %s10, %s1115
          %v1117 = vld [vmem:[%s1116] sm:$0x3]
          %v1119 = vlaneseq
          %v1120 = vshrl.u32 %v1119, 7
          %v1121 = vsub.s32 0, %v1120
          %v1122 = vrot.slane %v1117, %v1121
          %v1123 = vlaneseq
          %v1124 = vshrl.u32 %v1123, 7
          %v1125 = vsub.s32 1, %v1124
          %v1126 = vrot.slane %v1117, %v1125
          %1129 = vmatprep.subr.mxu0 0.0
          %1130 = vmatpush1.msra.mxu0 0.0
          %1131 = vmatprep.subr.mxu0 0.0
          %1132 = vmatpush1.msra.mxu0 0.0
          %1133 = vmatprep.subr.mxu0 0.0
          %1134 = vmatpush1.msra.mxu0 0.0
          %1135 = vmatprep.subr.mxu0 0.0
          %1136 = vmatpush1.msra.mxu0 0.0
          %1137 = vmatprep.subr.mxu0 0.0
          %1138 = vmatpush1.msra.mxu0 0.0
          %1139 = vmatprep.subr.mxu0 0.0
          %1140 = vmatpush1.msra.mxu0 0.0
          %1141 = vmatprep.subr.mxu0 0.0
          %1142 = vmatpush1.msra.mxu0 0.0
          %1143 = vmatprep.subr.mxu0 0.0
          %1144 = vmatpush1.msra.mxu0 0.0
          %1145 = vmatprep.subr.mxu0 %v1114
          %1146 = vmatpush1.msra.mxu0 %v1113
          %1147 = vmatprep.subr.mxu0 %v1112
          %1148 = vmatpush1.msra.mxu0 %v1111
          %1149 = vmatprep.subr.mxu0 %v1110
          %1150 = vmatpush1.msra.mxu0 %v1109
          %1151 = vmatprep.subr.mxu0 %v1108
          %1152 = vmatpush1.msra.mxu0 %v1107
          %1153 = vmatprep.subr.mxu0 %v1106
          %1154 = vmatpush1.msra.mxu0 %v1105
          %1155 = vmatprep.subr.mxu0 %v1104
          %1156 = vmatpush1.msra.mxu0 %v1103
          %1157 = vmatprep.subr.mxu0 %v1102
          %1158 = vmatpush1.msra.mxu0 %v1101
          %1159 = vmatprep.subr.mxu0 %v1100
          %1160 = vmatpush1.msra.mxu0 %v1099
          %1161 = vmatprep.subr.mxu0 0.0
          %1162 = vmatpush2.msra.mxu0 0.0
          %1163 = vmatprep.subr.mxu0 0.0
          %1164 = vmatpush2.msra.mxu0 0.0
          %1165 = vmatprep.subr.mxu0 0.0
          %1166 = vmatpush2.msra.mxu0 0.0
          %1167 = vmatprep.subr.mxu0 0.0
          %1168 = vmatpush2.msra.mxu0 0.0
          %1169 = vmatprep.subr.mxu0 0.0
          %1170 = vmatpush2.msra.mxu0 0.0
          %1171 = vmatprep.subr.mxu0 0.0
          %1172 = vmatpush2.msra.mxu0 0.0
          %1173 = vmatprep.subr.mxu0 0.0
          %1174 = vmatpush2.msra.mxu0 0.0
          %1175 = vmatprep.subr.mxu0 0.0
          %1176 = vmatpush2.msra.mxu0 0.0
          %1177 = vmatprep.subr.mxu0 0.0
          %1178 = vmatpush2.msra.mxu0 0.0
          %1179 = vmatprep.subr.mxu0 0.0
          %1180 = vmatpush2.msra.mxu0 0.0
          %1181 = vmatprep.subr.mxu0 0.0
          %1182 = vmatpush2.msra.mxu0 0.0
          %1183 = vmatprep.subr.mxu0 0.0
          %1184 = vmatpush2.msra.mxu0 0.0
          %1185 = vmatprep.subr.mxu0 0.0
          %1186 = vmatpush2.msra.mxu0 0.0
          %1187 = vmatprep.subr.mxu0 0.0
          %1188 = vmatpush2.msra.mxu0 0.0
          %1189 = vmatprep.subr.mxu0 0.0
          %1190 = vmatpush2.msra.mxu0 0.0
          %1191 = vmatprep.subr.mxu0 0.0
          %1192 = vmatpush2.msra.mxu0 0.0
          %1193 = vmatprep.mubr.f32.mxu0 0.0
          %1194 = vmatmul.mubr.f32.gmra.mxu0 %v990
          %v1195 = vpop.f32.mrf.mxu0
          %v1196 = vadd.f32 %v1122, %v1195
          %v1197 = vpop.f32.mrf.mxu0
          %v1198 = vadd.f32 %v1126, %v1197
          %1199 = vmatprep.mubr.f32.mxu0 0.0
          %1200 = vmatmul.mubr.f32.gmra.mxu0 %v993
          %v1201 = vpop.f32.mrf.mxu0
          %v1202 = vadd.f32 %v1122, %v1201
          %v1203 = vpop.f32.mrf.mxu0
          %v1204 = vadd.f32 %v1126, %v1203
          %1205 = vdwg.mxu0
          %v1206 = vmul.f32 %v1196, 0.5
          %v1207 = vmul.f32 %v1198, 0.5
          %v1208 = vmul.f32 %v1202, 0.5
          %v1209 = vmul.f32 %v1204, 0.5
          %v1210 = vmul.f32 %v1196, 0.70710677
          %v1211 = vmul.f32 %v1198, 0.70710677
          %v1212 = vmul.f32 %v1202, 0.70710677
          %v1213 = vmul.f32 %v1204, 0.70710677
          %v1214 = verf.f32.pop %v1210
          %v1215 = verf.f32.pop %v1211
          %v1216 = verf.f32.pop %v1212
          %v1217 = verf.f32.pop %v1213
          %v1218 = vadd.f32 %v1214, 1.0
          %v1219 = vadd.f32 %v1215, 1.0
          %v1220 = vadd.f32 %v1216, 1.0
          %v1221 = vadd.f32 %v1217, 1.0
          %v1222 = vmul.f32 %v1206, %v1218
          %v1223 = vmul.f32 %v1207, %v1219
          %v1224 = vmul.f32 %v1208, %v1220
          %v1225 = vmul.f32 %v1209, %v1221
          %1226 = vst [vmem:[#allocation4] sm:$0xff] %v1222
          %1227 = vst [vmem:[#allocation4 + $0x8] sm:$0xff] %v1223
          %1228 = vst [vmem:[#allocation4 + $0x10] sm:$0xff] %v1224
          %1229 = vst [vmem:[#allocation4 + $0x18] sm:$0xff] %v1225
        $region96: #{mlp_moe_forward.1} parent=75 // pred_fallthru
          _
        %v1230 = vlaneseq
        %v1231 = vand.u32 %v1230, 127
        %v1232 = vstv %s658
        %vm1233 = vcmp.eq.s32.totalorder %v1231, %v1232
        %v1234 = vld [vmem:[%s639] sm:$0xff]
        %v1235 = vld [vmem:[%s639 + $0x8] sm:$0xff]
        %v1236 = vsel %vm1233, %v1234, 0.0
        %v1237 = vsel %vm1233, %v1235, 0.0
        %vm1238 = vcmask 31744
        %v1239 = vsel %vm1238, %v1236, 0.0
        %1240 = vadd.xlane.f32.xlu0 %v1239
        %v1241 = vpop.xlane.xlu0 %1240
        %v1242 = vsel %vm1238, %v1237, 0.0
        %1243 = vadd.xlane.f32.xlu0 %v1242
        %v1244 = vpop.xlane.xlu0 %1243
        // Predicated region
        $region97: #{mlp_moe_forward.1} parent=75 // pred_check
          %p1245 = pneg %p665
        $region98: #{mlp_moe_forward.1} parent=75 // pred_check_branch
          %1247 = sbr.rel (%p1245) target = $region100
        $region99: #{mlp_moe_forward.1} parent=75 // pred_region
          %s1248 = smul.u32 %s658, 64
          %s1249 = smul.addr %s1248, 8
          %s1250 = scalar_lea.vmem [#allocation10], %s1249
          %v1251 = vld [vmem:[%s1250] sm:$0xff]
          %v1252 = vld [vmem:[%s1250 + $0x8] sm:$0xff]
          %v1253 = vld [vmem:[%s1250 + $0x10] sm:$0xff]
          %v1254 = vld [vmem:[%s1250 + $0x18] sm:$0xff]
          %v1255 = vld [vmem:[%s1250 + $0x20] sm:$0xff]
          %v1256 = vld [vmem:[%s1250 + $0x28] sm:$0xff]
          %v1257 = vld [vmem:[%s1250 + $0x30] sm:$0xff]
          %v1258 = vld [vmem:[%s1250 + $0x38] sm:$0xff]
          %v1259 = vld [vmem:[%s1250 + $0x40] sm:$0xff]
          %v1260 = vld [vmem:[%s1250 + $0x48] sm:$0xff]
          %v1261 = vld [vmem:[%s1250 + $0x50] sm:$0xff]
          %v1262 = vld [vmem:[%s1250 + $0x58] sm:$0xff]
          %v1263 = vld [vmem:[%s1250 + $0x60] sm:$0xff]
          %v1264 = vld [vmem:[%s1250 + $0x68] sm:$0xff]
          %v1265 = vld [vmem:[%s1250 + $0x70] sm:$0xff]
          %v1266 = vld [vmem:[%s1250 + $0x78] sm:$0xff]
          %v1267 = vld [vmem:[%s1250 + $0x80] sm:$0xff]
          %v1268 = vld [vmem:[%s1250 + $0x88] sm:$0xff]
          %v1269 = vld [vmem:[%s1250 + $0x90] sm:$0xff]
          %v1270 = vld [vmem:[%s1250 + $0x98] sm:$0xff]
          %v1271 = vld [vmem:[%s1250 + $0xa0] sm:$0xff]
          %v1272 = vld [vmem:[%s1250 + $0xa8] sm:$0xff]
          %v1273 = vld [vmem:[%s1250 + $0xb0] sm:$0xff]
          %v1274 = vld [vmem:[%s1250 + $0xb8] sm:$0xff]
          %v1275 = vld [vmem:[%s1250 + $0xc0] sm:$0xff]
          %v1276 = vld [vmem:[%s1250 + $0xc8] sm:$0xff]
          %v1277 = vld [vmem:[%s1250 + $0xd0] sm:$0xff]
          %v1278 = vld [vmem:[%s1250 + $0xd8] sm:$0xff]
          %v1279 = vld [vmem:[%s1250 + $0xe0] sm:$0xff]
          %v1280 = vld [vmem:[%s1250 + $0xe8] sm:$0xff]
          %v1281 = vld [vmem:[%s1250 + $0xf0] sm:$0xff]
          %v1282 = vld [vmem:[%s1250 + $0xf8] sm:$0xff]
          %v1283 = vld [vmem:[%s1250 + $0x100] sm:$0xff]
          %v1284 = vld [vmem:[%s1250 + $0x108] sm:$0xff]
          %v1285 = vld [vmem:[%s1250 + $0x110] sm:$0xff]
          %v1286 = vld [vmem:[%s1250 + $0x118] sm:$0xff]
          %v1287 = vld [vmem:[%s1250 + $0x120] sm:$0xff]
          %v1288 = vld [vmem:[%s1250 + $0x128] sm:$0xff]
          %v1289 = vld [vmem:[%s1250 + $0x130] sm:$0xff]
          %v1290 = vld [vmem:[%s1250 + $0x138] sm:$0xff]
          %v1291 = vld [vmem:[%s1250 + $0x140] sm:$0xff]
          %v1292 = vld [vmem:[%s1250 + $0x148] sm:$0xff]
          %v1293 = vld [vmem:[%s1250 + $0x150] sm:$0xff]
          %v1294 = vld [vmem:[%s1250 + $0x158] sm:$0xff]
          %v1295 = vld [vmem:[%s1250 + $0x160] sm:$0xff]
          %v1296 = vld [vmem:[%s1250 + $0x168] sm:$0xff]
          %v1297 = vld [vmem:[%s1250 + $0x170] sm:$0xff]
          %v1298 = vld [vmem:[%s1250 + $0x178] sm:$0xff]
          %v1299 = vld [vmem:[%s1250 + $0x180] sm:$0xff]
          %v1300 = vld [vmem:[%s1250 + $0x188] sm:$0xff]
          %v1301 = vld [vmem:[%s1250 + $0x190] sm:$0xff]
          %v1302 = vld [vmem:[%s1250 + $0x198] sm:$0xff]
          %v1303 = vld [vmem:[%s1250 + $0x1a0] sm:$0xff]
          %v1304 = vld [vmem:[%s1250 + $0x1a8] sm:$0xff]
          %v1305 = vld [vmem:[%s1250 + $0x1b0] sm:$0xff]
          %v1306 = vld [vmem:[%s1250 + $0x1b8] sm:$0xff]
          %v1307 = vld [vmem:[%s1250 + $0x1c0] sm:$0xff]
          %v1308 = vld [vmem:[%s1250 + $0x1c8] sm:$0xff]
          %v1309 = vld [vmem:[%s1250 + $0x1d0] sm:$0xff]
          %v1310 = vld [vmem:[%s1250 + $0x1d8] sm:$0xff]
          %v1311 = vld [vmem:[%s1250 + $0x1e0] sm:$0xff]
          %v1312 = vld [vmem:[%s1250 + $0x1e8] sm:$0xff]
          %v1313 = vld [vmem:[%s1250 + $0x1f0] sm:$0xff]
          %v1314 = vld [vmem:[%s1250 + $0x1f8] sm:$0xff]
          %s1315 = smul.u32 %s658, 2
          %s1316 = scalar_lea.vmem %s8, %s1315
          %v1317 = vld [vmem:[%s1316] sm:$0x3]
          %v1318 = vld [vmem:[#allocation3] sm:$0xff]
          %v1319 = vld [vmem:[#allocation3 + $0x8] sm:$0xff]
          %v1320 = vld [vmem:[#allocation3 + $0x10] sm:$0xff]
          %v1321 = vld [vmem:[#allocation3 + $0x18] sm:$0xff]
          %v1323 = vlaneseq
          %v1324 = vshrl.u32 %v1323, 7
          %v1325 = vsub.s32 0, %v1324
          %v1326 = vrot.slane %v1317, %v1325
          %v1327 = vlaneseq
          %v1328 = vshrl.u32 %v1327, 7
          %v1329 = vsub.s32 1, %v1328
          %v1330 = vrot.slane %v1317, %v1329
          %1333 = vmatprep.subr.mxu0 %v1282
          %1334 = vmatpush1.msra.mxu0 %v1281
          %1335 = vmatprep.subr.mxu0 %v1280
          %1336 = vmatpush1.msra.mxu0 %v1279
          %1337 = vmatprep.subr.mxu0 %v1278
          %1338 = vmatpush1.msra.mxu0 %v1277
          %1339 = vmatprep.subr.mxu0 %v1276
          %1340 = vmatpush1.msra.mxu0 %v1275
          %1341 = vmatprep.subr.mxu0 %v1274
          %1342 = vmatpush1.msra.mxu0 %v1273
          %1343 = vmatprep.subr.mxu0 %v1272
          %1344 = vmatpush1.msra.mxu0 %v1271
          %1345 = vmatprep.subr.mxu0 %v1270
          %1346 = vmatpush1.msra.mxu0 %v1269
          %1347 = vmatprep.subr.mxu0 %v1268
          %1348 = vmatpush1.msra.mxu0 %v1267
          %1349 = vmatprep.subr.mxu0 %v1266
          %1350 = vmatpush1.msra.mxu0 %v1265
          %1351 = vmatprep.subr.mxu0 %v1264
          %1352 = vmatpush1.msra.mxu0 %v1263
          %1353 = vmatprep.subr.mxu0 %v1262
          %1354 = vmatpush1.msra.mxu0 %v1261
          %1355 = vmatprep.subr.mxu0 %v1260
          %1356 = vmatpush1.msra.mxu0 %v1259
          %1357 = vmatprep.subr.mxu0 %v1258
          %1358 = vmatpush1.msra.mxu0 %v1257
          %1359 = vmatprep.subr.mxu0 %v1256
          %1360 = vmatpush1.msra.mxu0 %v1255
          %1361 = vmatprep.subr.mxu0 %v1254
          %1362 = vmatpush1.msra.mxu0 %v1253
          %1363 = vmatprep.subr.mxu0 %v1252
          %1364 = vmatpush1.msra.mxu0 %v1251
          %1365 = vmatprep.subr.mxu0 %v1314
          %1366 = vmatpush2.msra.mxu0 %v1313
          %1367 = vmatprep.subr.mxu0 %v1312
          %1368 = vmatpush2.msra.mxu0 %v1311
          %1369 = vmatprep.subr.mxu0 %v1310
          %1370 = vmatpush2.msra.mxu0 %v1309
          %1371 = vmatprep.subr.mxu0 %v1308
          %1372 = vmatpush2.msra.mxu0 %v1307
          %1373 = vmatprep.subr.mxu0 %v1306
          %1374 = vmatpush2.msra.mxu0 %v1305
          %1375 = vmatprep.subr.mxu0 %v1304
          %1376 = vmatpush2.msra.mxu0 %v1303
          %1377 = vmatprep.subr.mxu0 %v1302
          %1378 = vmatpush2.msra.mxu0 %v1301
          %1379 = vmatprep.subr.mxu0 %v1300
          %1380 = vmatpush2.msra.mxu0 %v1299
          %1381 = vmatprep.subr.mxu0 %v1298
          %1382 = vmatpush2.msra.mxu0 %v1297
          %1383 = vmatprep.subr.mxu0 %v1296
          %1384 = vmatpush2.msra.mxu0 %v1295
          %1385 = vmatprep.subr.mxu0 %v1294
          %1386 = vmatpush2.msra.mxu0 %v1293
          %1387 = vmatprep.subr.mxu0 %v1292
          %1388 = vmatpush2.msra.mxu0 %v1291
          %1389 = vmatprep.subr.mxu0 %v1290
          %1390 = vmatpush2.msra.mxu0 %v1289
          %1391 = vmatprep.subr.mxu0 %v1288
          %1392 = vmatpush2.msra.mxu0 %v1287
          %1393 = vmatprep.subr.mxu0 %v1286
          %1394 = vmatpush2.msra.mxu0 %v1285
          %1395 = vmatprep.subr.mxu0 %v1284
          %1396 = vmatpush2.msra.mxu0 %v1283
          %1397 = vmatprep.mubr.f32.mxu0 %v1319
          %1398 = vmatmul.mubr.f32.gmra.mxu0 %v1318
          %v1399 = vpop.f32.mrf.mxu0
          %v1400 = vadd.f32 %v1326, %v1399
          %v1401 = vpop.f32.mrf.mxu0
          %v1402 = vadd.f32 %v1330, %v1401
          %1403 = vmatprep.mubr.f32.mxu0 %v1321
          %1404 = vmatmul.mubr.f32.gmra.mxu0 %v1320
          %v1405 = vpop.f32.mrf.mxu0
          %v1406 = vadd.f32 %v1326, %v1405
          %v1407 = vpop.f32.mrf.mxu0
          %v1408 = vadd.f32 %v1330, %v1407
          %1409 = vdwg.mxu0
          %s1410 = smul.u32 %s57, 4
          %s1411 = smul.addr %s1410, 8
          %s1412 = scalar_lea.vmem %s647, %s1411
          %1413 = vst [vmem:[%s1412] sm:$0xff] %v1400
          %1414 = vst [vmem:[%s1412 + $0x8] sm:$0xff] %v1402
          %1415 = vst [vmem:[%s1412 + $0x10] sm:$0xff] %v1406
          %1416 = vst [vmem:[%s1412 + $0x18] sm:$0xff] %v1408
          %s1417 = smul.addr %s1410, 8
          %s1418 = scalar_lea.vmem [#allocation5], %s1417
          %v1419 = vld [vmem:[%s1418] sm:$0xff]
          %v1420 = vld [vmem:[%s1418 + $0x8] sm:$0xff]
          %v1421 = vld [vmem:[%s1418 + $0x10] sm:$0xff]
          %v1422 = vld [vmem:[%s1418 + $0x18] sm:$0xff]
          %v1423 = vmul.f32 %v1241, %v1400
          %v1424 = vmul.f32 %v1241, %v1402
          %v1425 = vmul.f32 %v1244, %v1406
          %v1426 = vmul.f32 %v1244, %v1408
          %v1427 = vadd.f32 %v1419, %v1423
          %v1428 = vadd.f32 %v1420, %v1424
          %v1429 = vadd.f32 %v1421, %v1425
          %v1430 = vadd.f32 %v1422, %v1426
          %1431 = vst [vmem:[%s1418] sm:$0xff] %v1427
          %1432 = vst [vmem:[%s1418 + $0x8] sm:$0xff] %v1428
          %1433 = vst [vmem:[%s1418 + $0x10] sm:$0xff] %v1429
          %1434 = vst [vmem:[%s1418 + $0x18] sm:$0xff] %v1430
          %v1435 = vld [vmem:[%s15] sm:$0xff]
          %v1436 = vld [vmem:[%s15 + $0x8] sm:$0xff]
          %v1437 = vld [vmem:[%s15 + $0x10] sm:$0xff]
          %v1438 = vld [vmem:[%s15 + $0x18] sm:$0xff]
          %v1439 = vld [vmem:[%s15 + $0x20] sm:$0xff]
          %v1440 = vld [vmem:[%s15 + $0x28] sm:$0xff]
          %v1441 = vld [vmem:[%s15 + $0x30] sm:$0xff]
          %v1442 = vld [vmem:[%s15 + $0x38] sm:$0xff]
          %v1443 = vld [vmem:[%s15 + $0x40] sm:$0xff]
          %v1444 = vld [vmem:[%s15 + $0x48] sm:$0xff]
          %v1445 = vld [vmem:[%s15 + $0x50] sm:$0xff]
          %v1446 = vld [vmem:[%s15 + $0x58] sm:$0xff]
          %v1447 = vld [vmem:[%s15 + $0x60] sm:$0xff]
          %v1448 = vld [vmem:[%s15 + $0x68] sm:$0xff]
          %v1449 = vld [vmem:[%s15 + $0x70] sm:$0xff]
          %v1450 = vld [vmem:[%s15 + $0x78] sm:$0xff]
          %v1451 = vld [vmem:[%s15 + $0x80] sm:$0xff]
          %v1452 = vld [vmem:[%s15 + $0x88] sm:$0xff]
          %v1453 = vld [vmem:[%s15 + $0x90] sm:$0xff]
          %v1454 = vld [vmem:[%s15 + $0x98] sm:$0xff]
          %v1455 = vld [vmem:[%s15 + $0xa0] sm:$0xff]
          %v1456 = vld [vmem:[%s15 + $0xa8] sm:$0xff]
          %v1457 = vld [vmem:[%s15 + $0xb0] sm:$0xff]
          %v1458 = vld [vmem:[%s15 + $0xb8] sm:$0xff]
          %v1459 = vld [vmem:[%s15 + $0xc0] sm:$0xff]
          %v1460 = vld [vmem:[%s15 + $0xc8] sm:$0xff]
          %v1461 = vld [vmem:[%s15 + $0xd0] sm:$0xff]
          %v1462 = vld [vmem:[%s15 + $0xd8] sm:$0xff]
          %v1463 = vld [vmem:[%s15 + $0xe0] sm:$0xff]
          %v1464 = vld [vmem:[%s15 + $0xe8] sm:$0xff]
          %v1465 = vld [vmem:[%s15 + $0xf0] sm:$0xff]
          %v1466 = vld [vmem:[%s15 + $0xf8] sm:$0xff]
          %v1467 = vld [vmem:[%s15 + $0x100] sm:$0xff]
          %v1468 = vld [vmem:[%s15 + $0x108] sm:$0xff]
          %v1469 = vld [vmem:[%s15 + $0x110] sm:$0xff]
          %v1470 = vld [vmem:[%s15 + $0x118] sm:$0xff]
          %v1471 = vld [vmem:[%s15 + $0x120] sm:$0xff]
          %v1472 = vld [vmem:[%s15 + $0x128] sm:$0xff]
          %v1473 = vld [vmem:[%s15 + $0x130] sm:$0xff]
          %v1474 = vld [vmem:[%s15 + $0x138] sm:$0xff]
          %v1475 = vld [vmem:[%s15 + $0x140] sm:$0xff]
          %v1476 = vld [vmem:[%s15 + $0x148] sm:$0xff]
          %v1477 = vld [vmem:[%s15 + $0x150] sm:$0xff]
          %v1478 = vld [vmem:[%s15 + $0x158] sm:$0xff]
          %v1479 = vld [vmem:[%s15 + $0x160] sm:$0xff]
          %v1480 = vld [vmem:[%s15 + $0x168] sm:$0xff]
          %v1481 = vld [vmem:[%s15 + $0x170] sm:$0xff]
          %v1482 = vld [vmem:[%s15 + $0x178] sm:$0xff]
          %v1483 = vld [vmem:[%s15 + $0x180] sm:$0xff]
          %v1484 = vld [vmem:[%s15 + $0x188] sm:$0xff]
          %v1485 = vld [vmem:[%s15 + $0x190] sm:$0xff]
          %v1486 = vld [vmem:[%s15 + $0x198] sm:$0xff]
          %v1487 = vld [vmem:[%s15 + $0x1a0] sm:$0xff]
          %v1488 = vld [vmem:[%s15 + $0x1a8] sm:$0xff]
          %v1489 = vld [vmem:[%s15 + $0x1b0] sm:$0xff]
          %v1490 = vld [vmem:[%s15 + $0x1b8] sm:$0xff]
          %v1491 = vld [vmem:[%s15 + $0x1c0] sm:$0xff]
          %v1492 = vld [vmem:[%s15 + $0x1c8] sm:$0xff]
          %v1493 = vld [vmem:[%s15 + $0x1d0] sm:$0xff]
          %v1494 = vld [vmem:[%s15 + $0x1d8] sm:$0xff]
          %v1495 = vld [vmem:[%s15 + $0x1e0] sm:$0xff]
          %v1496 = vld [vmem:[%s15 + $0x1e8] sm:$0xff]
          %v1497 = vld [vmem:[%s15 + $0x1f0] sm:$0xff]
          %v1498 = vld [vmem:[%s15 + $0x1f8] sm:$0xff]
          %v1499 = vld [vmem:[%s16] sm:$0x3]
          %v1500 = vld [vmem:[#allocation2] sm:$0xff]
          %v1501 = vld [vmem:[#allocation2 + $0x8] sm:$0xff]
          %v1502 = vld [vmem:[#allocation2 + $0x10] sm:$0xff]
          %v1503 = vld [vmem:[#allocation2 + $0x18] sm:$0xff]
          %v1505 = vlaneseq
          %v1506 = vshrl.u32 %v1505, 7
          %v1507 = vsub.s32 0, %v1506
          %v1508 = vrot.slane %v1499, %v1507
          %v1509 = vlaneseq
          %v1510 = vshrl.u32 %v1509, 7
          %v1511 = vsub.s32 1, %v1510
          %v1512 = vrot.slane %v1499, %v1511
          %1515 = vmatprep.subr.mxu0 %v1466
          %1516 = vmatpush1.msra.mxu0 %v1465
          %1517 = vmatprep.subr.mxu0 %v1464
          %1518 = vmatpush1.msra.mxu0 %v1463
          %1519 = vmatprep.subr.mxu0 %v1462
          %1520 = vmatpush1.msra.mxu0 %v1461
          %1521 = vmatprep.subr.mxu0 %v1460
          %1522 = vmatpush1.msra.mxu0 %v1459
          %1523 = vmatprep.subr.mxu0 %v1458
          %1524 = vmatpush1.msra.mxu0 %v1457
          %1525 = vmatprep.subr.mxu0 %v1456
          %1526 = vmatpush1.msra.mxu0 %v1455
          %1527 = vmatprep.subr.mxu0 %v1454
          %1528 = vmatpush1.msra.mxu0 %v1453
          %1529 = vmatprep.subr.mxu0 %v1452
          %1530 = vmatpush1.msra.mxu0 %v1451
          %1531 = vmatprep.subr.mxu0 %v1450
          %1532 = vmatpush1.msra.mxu0 %v1449
          %1533 = vmatprep.subr.mxu0 %v1448
          %1534 = vmatpush1.msra.mxu0 %v1447
          %1535 = vmatprep.subr.mxu0 %v1446
          %1536 = vmatpush1.msra.mxu0 %v1445
          %1537 = vmatprep.subr.mxu0 %v1444
          %1538 = vmatpush1.msra.mxu0 %v1443
          %1539 = vmatprep.subr.mxu0 %v1442
          %1540 = vmatpush1.msra.mxu0 %v1441
          %1541 = vmatprep.subr.mxu0 %v1440
          %1542 = vmatpush1.msra.mxu0 %v1439
          %1543 = vmatprep.subr.mxu0 %v1438
          %1544 = vmatpush1.msra.mxu0 %v1437
          %1545 = vmatprep.subr.mxu0 %v1436
          %1546 = vmatpush1.msra.mxu0 %v1435
          %1547 = vmatprep.subr.mxu0 %v1498
          %1548 = vmatpush2.msra.mxu0 %v1497
          %1549 = vmatprep.subr.mxu0 %v1496
          %1550 = vmatpush2.msra.mxu0 %v1495
          %1551 = vmatprep.subr.mxu0 %v1494
          %1552 = vmatpush2.msra.mxu0 %v1493
          %1553 = vmatprep.subr.mxu0 %v1492
          %1554 = vmatpush2.msra.mxu0 %v1491
          %1555 = vmatprep.subr.mxu0 %v1490
          %1556 = vmatpush2.msra.mxu0 %v1489
          %1557 = vmatprep.subr.mxu0 %v1488
          %1558 = vmatpush2.msra.mxu0 %v1487
          %1559 = vmatprep.subr.mxu0 %v1486
          %1560 = vmatpush2.msra.mxu0 %v1485
          %1561 = vmatprep.subr.mxu0 %v1484
          %1562 = vmatpush2.msra.mxu0 %v1483
          %1563 = vmatprep.subr.mxu0 %v1482
          %1564 = vmatpush2.msra.mxu0 %v1481
          %1565 = vmatprep.subr.mxu0 %v1480
          %1566 = vmatpush2.msra.mxu0 %v1479
          %1567 = vmatprep.subr.mxu0 %v1478
          %1568 = vmatpush2.msra.mxu0 %v1477
          %1569 = vmatprep.subr.mxu0 %v1476
          %1570 = vmatpush2.msra.mxu0 %v1475
          %1571 = vmatprep.subr.mxu0 %v1474
          %1572 = vmatpush2.msra.mxu0 %v1473
          %1573 = vmatprep.subr.mxu0 %v1472
          %1574 = vmatpush2.msra.mxu0 %v1471
          %1575 = vmatprep.subr.mxu0 %v1470
          %1576 = vmatpush2.msra.mxu0 %v1469
          %1577 = vmatprep.subr.mxu0 %v1468
          %1578 = vmatpush2.msra.mxu0 %v1467
          %1579 = vmatprep.mubr.f32.mxu0 %v1501
          %1580 = vmatmul.mubr.f32.gmra.mxu0 %v1500
          %v1581 = vpop.f32.mrf.mxu0
          %v1582 = vadd.f32 %v1508, %v1581
          %v1583 = vpop.f32.mrf.mxu0
          %v1584 = vadd.f32 %v1512, %v1583
          %1585 = vmatprep.mubr.f32.mxu0 %v1503
          %1586 = vmatmul.mubr.f32.gmra.mxu0 %v1502
          %v1587 = vpop.f32.mrf.mxu0
          %v1588 = vadd.f32 %v1508, %v1587
          %v1589 = vpop.f32.mrf.mxu0
          %v1590 = vadd.f32 %v1512, %v1589
          %1591 = vdwg.mxu0
          %s1592 = smul.addr %s1410, 8
          %s1593 = scalar_lea.vmem %s654, %s1592
          %1594 = vst [vmem:[%s1593] sm:$0xff] %v1582
          %1595 = vst [vmem:[%s1593 + $0x8] sm:$0xff] %v1584
          %1596 = vst [vmem:[%s1593 + $0x10] sm:$0xff] %v1588
          %1597 = vst [vmem:[%s1593 + $0x18] sm:$0xff] %v1590
        $region100: #{mlp_moe_forward.1} parent=75 // pred_fallthru
          _
        // Predicated region
        $region101: #{mlp_moe_forward.1} parent=75 // pred_check
          _
        $region102: #{mlp_moe_forward.1} parent=75 // pred_check_branch
          %1599 = sbr.rel (%p947) target = $region104
        $region103: #{mlp_moe_forward.1} parent=75 // pred_region
          %s1600 = smul.u32 %s658, 64
          %s1601 = smul.addr %s1600, 8
          %s1602 = scalar_lea.vmem [#allocation10], %s1601
          %v1603 = vld [vmem:[%s1602] sm:$0xff]
          %v1604 = vld [vmem:[%s1602 + $0x8] sm:$0xff]
          %v1605 = vld [vmem:[%s1602 + $0x10] sm:$0xff]
          %v1606 = vld [vmem:[%s1602 + $0x18] sm:$0xff]
          %v1607 = vld [vmem:[%s1602 + $0x20] sm:$0xff]
          %v1608 = vld [vmem:[%s1602 + $0x28] sm:$0xff]
          %v1609 = vld [vmem:[%s1602 + $0x30] sm:$0xff]
          %v1610 = vld [vmem:[%s1602 + $0x38] sm:$0xff]
          %v1611 = vld [vmem:[%s1602 + $0x40] sm:$0xff]
          %v1612 = vld [vmem:[%s1602 + $0x48] sm:$0xff]
          %v1613 = vld [vmem:[%s1602 + $0x50] sm:$0xff]
          %v1614 = vld [vmem:[%s1602 + $0x58] sm:$0xff]
          %v1615 = vld [vmem:[%s1602 + $0x60] sm:$0xff]
          %v1616 = vld [vmem:[%s1602 + $0x68] sm:$0xff]
          %v1617 = vld [vmem:[%s1602 + $0x70] sm:$0xff]
          %v1618 = vld [vmem:[%s1602 + $0x78] sm:$0xff]
          %v1619 = vld [vmem:[%s1602 + $0x80] sm:$0xff]
          %v1620 = vld [vmem:[%s1602 + $0x88] sm:$0xff]
          %v1621 = vld [vmem:[%s1602 + $0x90] sm:$0xff]
          %v1622 = vld [vmem:[%s1602 + $0x98] sm:$0xff]
          %v1623 = vld [vmem:[%s1602 + $0xa0] sm:$0xff]
          %v1624 = vld [vmem:[%s1602 + $0xa8] sm:$0xff]
          %v1625 = vld [vmem:[%s1602 + $0xb0] sm:$0xff]
          %v1626 = vld [vmem:[%s1602 + $0xb8] sm:$0xff]
          %v1627 = vld [vmem:[%s1602 + $0xc0] sm:$0xff]
          %v1628 = vld [vmem:[%s1602 + $0xc8] sm:$0xff]
          %v1629 = vld [vmem:[%s1602 + $0xd0] sm:$0xff]
          %v1630 = vld [vmem:[%s1602 + $0xd8] sm:$0xff]
          %v1631 = vld [vmem:[%s1602 + $0xe0] sm:$0xff]
          %v1632 = vld [vmem:[%s1602 + $0xe8] sm:$0xff]
          %v1633 = vld [vmem:[%s1602 + $0xf0] sm:$0xff]
          %v1634 = vld [vmem:[%s1602 + $0xf8] sm:$0xff]
          %v1635 = vld [vmem:[%s1602 + $0x100] sm:$0xff]
          %v1636 = vld [vmem:[%s1602 + $0x108] sm:$0xff]
          %v1637 = vld [vmem:[%s1602 + $0x110] sm:$0xff]
          %v1638 = vld [vmem:[%s1602 + $0x118] sm:$0xff]
          %v1639 = vld [vmem:[%s1602 + $0x120] sm:$0xff]
          %v1640 = vld [vmem:[%s1602 + $0x128] sm:$0xff]
          %v1641 = vld [vmem:[%s1602 + $0x130] sm:$0xff]
          %v1642 = vld [vmem:[%s1602 + $0x138] sm:$0xff]
          %v1643 = vld [vmem:[%s1602 + $0x140] sm:$0xff]
          %v1644 = vld [vmem:[%s1602 + $0x148] sm:$0xff]
          %v1645 = vld [vmem:[%s1602 + $0x150] sm:$0xff]
          %v1646 = vld [vmem:[%s1602 + $0x158] sm:$0xff]
          %v1647 = vld [vmem:[%s1602 + $0x160] sm:$0xff]
          %v1648 = vld [vmem:[%s1602 + $0x168] sm:$0xff]
          %v1649 = vld [vmem:[%s1602 + $0x170] sm:$0xff]
          %v1650 = vld [vmem:[%s1602 + $0x178] sm:$0xff]
          %v1651 = vld [vmem:[%s1602 + $0x180] sm:$0xff]
          %v1652 = vld [vmem:[%s1602 + $0x188] sm:$0xff]
          %v1653 = vld [vmem:[%s1602 + $0x190] sm:$0xff]
          %v1654 = vld [vmem:[%s1602 + $0x198] sm:$0xff]
          %v1655 = vld [vmem:[%s1602 + $0x1a0] sm:$0xff]
          %v1656 = vld [vmem:[%s1602 + $0x1a8] sm:$0xff]
          %v1657 = vld [vmem:[%s1602 + $0x1b0] sm:$0xff]
          %v1658 = vld [vmem:[%s1602 + $0x1b8] sm:$0xff]
          %v1659 = vld [vmem:[%s1602 + $0x1c0] sm:$0xff]
          %v1660 = vld [vmem:[%s1602 + $0x1c8] sm:$0xff]
          %v1661 = vld [vmem:[%s1602 + $0x1d0] sm:$0xff]
          %v1662 = vld [vmem:[%s1602 + $0x1d8] sm:$0xff]
          %v1663 = vld [vmem:[%s1602 + $0x1e0] sm:$0xff]
          %v1664 = vld [vmem:[%s1602 + $0x1e8] sm:$0xff]
          %v1665 = vld [vmem:[%s1602 + $0x1f0] sm:$0xff]
          %v1666 = vld [vmem:[%s1602 + $0x1f8] sm:$0xff]
          %s1667 = smul.u32 %s658, 2
          %s1668 = scalar_lea.vmem %s8, %s1667
          %v1669 = vld [vmem:[%s1668] sm:$0x3]
          %v1670 = vld [vmem:[#allocation3] sm:$0xff]
          %v1671 = vld [vmem:[#allocation3 + $0x8] sm:$0xff]
          %v1672 = vld [vmem:[#allocation3 + $0x10] sm:$0xff]
          %v1673 = vld [vmem:[#allocation3 + $0x18] sm:$0xff]
          %v1675 = vlaneseq
          %v1676 = vshrl.u32 %v1675, 7
          %v1677 = vsub.s32 0, %v1676
          %v1678 = vrot.slane %v1669, %v1677
          %v1679 = vlaneseq
          %v1680 = vshrl.u32 %v1679, 7
          %v1681 = vsub.s32 1, %v1680
          %v1682 = vrot.slane %v1669, %v1681
          %1685 = vmatprep.subr.mxu0 %v1634
          %1686 = vmatpush1.msra.mxu0 %v1633
          %1687 = vmatprep.subr.mxu0 %v1632
          %1688 = vmatpush1.msra.mxu0 %v1631
          %1689 = vmatprep.subr.mxu0 %v1630
          %1690 = vmatpush1.msra.mxu0 %v1629
          %1691 = vmatprep.subr.mxu0 %v1628
          %1692 = vmatpush1.msra.mxu0 %v1627
          %1693 = vmatprep.subr.mxu0 %v1626
          %1694 = vmatpush1.msra.mxu0 %v1625
          %1695 = vmatprep.subr.mxu0 %v1624
          %1696 = vmatpush1.msra.mxu0 %v1623
          %1697 = vmatprep.subr.mxu0 %v1622
          %1698 = vmatpush1.msra.mxu0 %v1621
          %1699 = vmatprep.subr.mxu0 %v1620
          %1700 = vmatpush1.msra.mxu0 %v1619
          %1701 = vmatprep.subr.mxu0 %v1618
          %1702 = vmatpush1.msra.mxu0 %v1617
          %1703 = vmatprep.subr.mxu0 %v1616
          %1704 = vmatpush1.msra.mxu0 %v1615
          %1705 = vmatprep.subr.mxu0 %v1614
          %1706 = vmatpush1.msra.mxu0 %v1613
          %1707 = vmatprep.subr.mxu0 %v1612
          %1708 = vmatpush1.msra.mxu0 %v1611
          %1709 = vmatprep.subr.mxu0 %v1610
          %1710 = vmatpush1.msra.mxu0 %v1609
          %1711 = vmatprep.subr.mxu0 %v1608
          %1712 = vmatpush1.msra.mxu0 %v1607
          %1713 = vmatprep.subr.mxu0 %v1606
          %1714 = vmatpush1.msra.mxu0 %v1605
          %1715 = vmatprep.subr.mxu0 %v1604
          %1716 = vmatpush1.msra.mxu0 %v1603
          %1717 = vmatprep.subr.mxu0 %v1666
          %1718 = vmatpush2.msra.mxu0 %v1665
          %1719 = vmatprep.subr.mxu0 %v1664
          %1720 = vmatpush2.msra.mxu0 %v1663
          %1721 = vmatprep.subr.mxu0 %v1662
          %1722 = vmatpush2.msra.mxu0 %v1661
          %1723 = vmatprep.subr.mxu0 %v1660
          %1724 = vmatpush2.msra.mxu0 %v1659
          %1725 = vmatprep.subr.mxu0 %v1658
          %1726 = vmatpush2.msra.mxu0 %v1657
          %1727 = vmatprep.subr.mxu0 %v1656
          %1728 = vmatpush2.msra.mxu0 %v1655
          %1729 = vmatprep.subr.mxu0 %v1654
          %1730 = vmatpush2.msra.mxu0 %v1653
          %1731 = vmatprep.subr.mxu0 %v1652
          %1732 = vmatpush2.msra.mxu0 %v1651
          %1733 = vmatprep.subr.mxu0 %v1650
          %1734 = vmatpush2.msra.mxu0 %v1649
          %1735 = vmatprep.subr.mxu0 %v1648
          %1736 = vmatpush2.msra.mxu0 %v1647
          %1737 = vmatprep.subr.mxu0 %v1646
          %1738 = vmatpush2.msra.mxu0 %v1645
          %1739 = vmatprep.subr.mxu0 %v1644
          %1740 = vmatpush2.msra.mxu0 %v1643
          %1741 = vmatprep.subr.mxu0 %v1642
          %1742 = vmatpush2.msra.mxu0 %v1641
          %1743 = vmatprep.subr.mxu0 %v1640
          %1744 = vmatpush2.msra.mxu0 %v1639
          %1745 = vmatprep.subr.mxu0 %v1638
          %1746 = vmatpush2.msra.mxu0 %v1637
          %1747 = vmatprep.subr.mxu0 %v1636
          %1748 = vmatpush2.msra.mxu0 %v1635
          %1749 = vmatprep.mubr.f32.mxu0 %v1671
          %1750 = vmatmul.mubr.f32.gmra.mxu0 %v1670
          %v1751 = vpop.f32.mrf.mxu0
          %v1752 = vadd.f32 %v1678, %v1751
          %v1753 = vpop.f32.mrf.mxu0
          %v1754 = vadd.f32 %v1682, %v1753
          %1755 = vmatprep.mubr.f32.mxu0 %v1673
          %1756 = vmatmul.mubr.f32.gmra.mxu0 %v1672
          %v1757 = vpop.f32.mrf.mxu0
          %v1758 = vadd.f32 %v1678, %v1757
          %v1759 = vpop.f32.mrf.mxu0
          %v1760 = vadd.f32 %v1682, %v1759
          %1761 = vdwg.mxu0
          %s1762 = smul.u32 %s663, 64
          %s1763 = smul.addr %s1762, 8
          %s1764 = scalar_lea.vmem [#allocation15], %s1763
          %v1765 = vld [vmem:[%s1764] sm:$0xff]
          %v1766 = vld [vmem:[%s1764 + $0x8] sm:$0xff]
          %v1767 = vld [vmem:[%s1764 + $0x10] sm:$0xff]
          %v1768 = vld [vmem:[%s1764 + $0x18] sm:$0xff]
          %v1769 = vld [vmem:[%s1764 + $0x20] sm:$0xff]
          %v1770 = vld [vmem:[%s1764 + $0x28] sm:$0xff]
          %v1771 = vld [vmem:[%s1764 + $0x30] sm:$0xff]
          %v1772 = vld [vmem:[%s1764 + $0x38] sm:$0xff]
          %v1773 = vld [vmem:[%s1764 + $0x40] sm:$0xff]
          %v1774 = vld [vmem:[%s1764 + $0x48] sm:$0xff]
          %v1775 = vld [vmem:[%s1764 + $0x50] sm:$0xff]
          %v1776 = vld [vmem:[%s1764 + $0x58] sm:$0xff]
          %v1777 = vld [vmem:[%s1764 + $0x60] sm:$0xff]
          %v1778 = vld [vmem:[%s1764 + $0x68] sm:$0xff]
          %v1779 = vld [vmem:[%s1764 + $0x70] sm:$0xff]
          %v1780 = vld [vmem:[%s1764 + $0x78] sm:$0xff]
          %v1781 = vld [vmem:[%s1764 + $0x80] sm:$0xff]
          %v1782 = vld [vmem:[%s1764 + $0x88] sm:$0xff]
          %v1783 = vld [vmem:[%s1764 + $0x90] sm:$0xff]
          %v1784 = vld [vmem:[%s1764 + $0x98] sm:$0xff]
          %v1785 = vld [vmem:[%s1764 + $0xa0] sm:$0xff]
          %v1786 = vld [vmem:[%s1764 + $0xa8] sm:$0xff]
          %v1787 = vld [vmem:[%s1764 + $0xb0] sm:$0xff]
          %v1788 = vld [vmem:[%s1764 + $0xb8] sm:$0xff]
          %v1789 = vld [vmem:[%s1764 + $0xc0] sm:$0xff]
          %v1790 = vld [vmem:[%s1764 + $0xc8] sm:$0xff]
          %v1791 = vld [vmem:[%s1764 + $0xd0] sm:$0xff]
          %v1792 = vld [vmem:[%s1764 + $0xd8] sm:$0xff]
          %v1793 = vld [vmem:[%s1764 + $0xe0] sm:$0xff]
          %v1794 = vld [vmem:[%s1764 + $0xe8] sm:$0xff]
          %v1795 = vld [vmem:[%s1764 + $0xf0] sm:$0xff]
          %v1796 = vld [vmem:[%s1764 + $0xf8] sm:$0xff]
          %v1797 = vld [vmem:[%s1764 + $0x100] sm:$0xff]
          %v1798 = vld [vmem:[%s1764 + $0x108] sm:$0xff]
          %v1799 = vld [vmem:[%s1764 + $0x110] sm:$0xff]
          %v1800 = vld [vmem:[%s1764 + $0x118] sm:$0xff]
          %v1801 = vld [vmem:[%s1764 + $0x120] sm:$0xff]
          %v1802 = vld [vmem:[%s1764 + $0x128] sm:$0xff]
          %v1803 = vld [vmem:[%s1764 + $0x130] sm:$0xff]
          %v1804 = vld [vmem:[%s1764 + $0x138] sm:$0xff]
          %v1805 = vld [vmem:[%s1764 + $0x140] sm:$0xff]
          %v1806 = vld [vmem:[%s1764 + $0x148] sm:$0xff]
          %v1807 = vld [vmem:[%s1764 + $0x150] sm:$0xff]
          %v1808 = vld [vmem:[%s1764 + $0x158] sm:$0xff]
          %v1809 = vld [vmem:[%s1764 + $0x160] sm:$0xff]
          %v1810 = vld [vmem:[%s1764 + $0x168] sm:$0xff]
          %v1811 = vld [vmem:[%s1764 + $0x170] sm:$0xff]
          %v1812 = vld [vmem:[%s1764 + $0x178] sm:$0xff]
          %v1813 = vld [vmem:[%s1764 + $0x180] sm:$0xff]
          %v1814 = vld [vmem:[%s1764 + $0x188] sm:$0xff]
          %v1815 = vld [vmem:[%s1764 + $0x190] sm:$0xff]
          %v1816 = vld [vmem:[%s1764 + $0x198] sm:$0xff]
          %v1817 = vld [vmem:[%s1764 + $0x1a0] sm:$0xff]
          %v1818 = vld [vmem:[%s1764 + $0x1a8] sm:$0xff]
          %v1819 = vld [vmem:[%s1764 + $0x1b0] sm:$0xff]
          %v1820 = vld [vmem:[%s1764 + $0x1b8] sm:$0xff]
          %v1821 = vld [vmem:[%s1764 + $0x1c0] sm:$0xff]
          %v1822 = vld [vmem:[%s1764 + $0x1c8] sm:$0xff]
          %v1823 = vld [vmem:[%s1764 + $0x1d0] sm:$0xff]
          %v1824 = vld [vmem:[%s1764 + $0x1d8] sm:$0xff]
          %v1825 = vld [vmem:[%s1764 + $0x1e0] sm:$0xff]
          %v1826 = vld [vmem:[%s1764 + $0x1e8] sm:$0xff]
          %v1827 = vld [vmem:[%s1764 + $0x1f0] sm:$0xff]
          %v1828 = vld [vmem:[%s1764 + $0x1f8] sm:$0xff]
          %s1829 = smul.u32 %s663, 2
          %s1830 = scalar_lea.vmem %s12, %s1829
          %v1831 = vld [vmem:[%s1830] sm:$0x3]
          %v1832 = vld [vmem:[#allocation4] sm:$0xff]
          %v1833 = vld [vmem:[#allocation4 + $0x8] sm:$0xff]
          %v1834 = vld [vmem:[#allocation4 + $0x10] sm:$0xff]
          %v1835 = vld [vmem:[#allocation4 + $0x18] sm:$0xff]
          %v1837 = vlaneseq
          %v1838 = vshrl.u32 %v1837, 7
          %v1839 = vsub.s32 0, %v1838
          %v1840 = vrot.slane %v1831, %v1839
          %v1841 = vlaneseq
          %v1842 = vshrl.u32 %v1841, 7
          %v1843 = vsub.s32 1, %v1842
          %v1844 = vrot.slane %v1831, %v1843
          %1847 = vmatprep.subr.mxu0 %v1796
          %1848 = vmatpush1.msra.mxu0 %v1795
          %1849 = vmatprep.subr.mxu0 %v1794
          %1850 = vmatpush1.msra.mxu0 %v1793
          %1851 = vmatprep.subr.mxu0 %v1792
          %1852 = vmatpush1.msra.mxu0 %v1791
          %1853 = vmatprep.subr.mxu0 %v1790
          %1854 = vmatpush1.msra.mxu0 %v1789
          %1855 = vmatprep.subr.mxu0 %v1788
          %1856 = vmatpush1.msra.mxu0 %v1787
          %1857 = vmatprep.subr.mxu0 %v1786
          %1858 = vmatpush1.msra.mxu0 %v1785
          %1859 = vmatprep.subr.mxu0 %v1784
          %1860 = vmatpush1.msra.mxu0 %v1783
          %1861 = vmatprep.subr.mxu0 %v1782
          %1862 = vmatpush1.msra.mxu0 %v1781
          %1863 = vmatprep.subr.mxu0 %v1780
          %1864 = vmatpush1.msra.mxu0 %v1779
          %1865 = vmatprep.subr.mxu0 %v1778
          %1866 = vmatpush1.msra.mxu0 %v1777
          %1867 = vmatprep.subr.mxu0 %v1776
          %1868 = vmatpush1.msra.mxu0 %v1775
          %1869 = vmatprep.subr.mxu0 %v1774
          %1870 = vmatpush1.msra.mxu0 %v1773
          %1871 = vmatprep.subr.mxu0 %v1772
          %1872 = vmatpush1.msra.mxu0 %v1771
          %1873 = vmatprep.subr.mxu0 %v1770
          %1874 = vmatpush1.msra.mxu0 %v1769
          %1875 = vmatprep.subr.mxu0 %v1768
          %1876 = vmatpush1.msra.mxu0 %v1767
          %1877 = vmatprep.subr.mxu0 %v1766
          %1878 = vmatpush1.msra.mxu0 %v1765
          %1879 = vmatprep.subr.mxu0 %v1828
          %1880 = vmatpush2.msra.mxu0 %v1827
          %1881 = vmatprep.subr.mxu0 %v1826
          %1882 = vmatpush2.msra.mxu0 %v1825
          %1883 = vmatprep.subr.mxu0 %v1824
          %1884 = vmatpush2.msra.mxu0 %v1823
          %1885 = vmatprep.subr.mxu0 %v1822
          %1886 = vmatpush2.msra.mxu0 %v1821
          %1887 = vmatprep.subr.mxu0 %v1820
          %1888 = vmatpush2.msra.mxu0 %v1819
          %1889 = vmatprep.subr.mxu0 %v1818
          %1890 = vmatpush2.msra.mxu0 %v1817
          %1891 = vmatprep.subr.mxu0 %v1816
          %1892 = vmatpush2.msra.mxu0 %v1815
          %1893 = vmatprep.subr.mxu0 %v1814
          %1894 = vmatpush2.msra.mxu0 %v1813
          %1895 = vmatprep.subr.mxu0 %v1812
          %1896 = vmatpush2.msra.mxu0 %v1811
          %1897 = vmatprep.subr.mxu0 %v1810
          %1898 = vmatpush2.msra.mxu0 %v1809
          %1899 = vmatprep.subr.mxu0 %v1808
          %1900 = vmatpush2.msra.mxu0 %v1807
          %1901 = vmatprep.subr.mxu0 %v1806
          %1902 = vmatpush2.msra.mxu0 %v1805
          %1903 = vmatprep.subr.mxu0 %v1804
          %1904 = vmatpush2.msra.mxu0 %v1803
          %1905 = vmatprep.subr.mxu0 %v1802
          %1906 = vmatpush2.msra.mxu0 %v1801
          %1907 = vmatprep.subr.mxu0 %v1800
          %1908 = vmatpush2.msra.mxu0 %v1799
          %1909 = vmatprep.subr.mxu0 %v1798
          %1910 = vmatpush2.msra.mxu0 %v1797
          %1911 = vmatprep.mubr.f32.mxu0 %v1833
          %1912 = vmatmul.mubr.f32.gmra.mxu0 %v1832
          %v1913 = vpop.f32.mrf.mxu0
          %v1914 = vadd.f32 %v1840, %v1913
          %v1915 = vpop.f32.mrf.mxu0
          %v1916 = vadd.f32 %v1844, %v1915
          %1917 = vmatprep.mubr.f32.mxu0 %v1835
          %1918 = vmatmul.mubr.f32.gmra.mxu0 %v1834
          %v1919 = vpop.f32.mrf.mxu0
          %v1920 = vadd.f32 %v1840, %v1919
          %v1921 = vpop.f32.mrf.mxu0
          %v1922 = vadd.f32 %v1844, %v1921
          %1923 = vdwg.mxu0
          %s1924 = smul.u32 %s57, 4
          %s1925 = smul.addr %s1924, 8
          %s1926 = scalar_lea.vmem [#allocation5], %s1925
          %v1927 = vld [vmem:[%s1926] sm:$0xff]
          %v1928 = vld [vmem:[%s1926 + $0x8] sm:$0xff]
          %v1929 = vld [vmem:[%s1926 + $0x10] sm:$0xff]
          %v1930 = vld [vmem:[%s1926 + $0x18] sm:$0xff]
          %v1931 = vadd.f32 %v1752, %v1914
          %v1932 = vadd.f32 %v1754, %v1916
          %v1933 = vadd.f32 %v1758, %v1920
          %v1934 = vadd.f32 %v1760, %v1922
          %v1935 = vmul.f32 %v1241, %v1931
          %v1936 = vmul.f32 %v1241, %v1932
          %v1937 = vmul.f32 %v1244, %v1933
          %v1938 = vmul.f32 %v1244, %v1934
          %v1939 = vadd.f32 %v1927, %v1935
          %v1940 = vadd.f32 %v1928, %v1936
          %v1941 = vadd.f32 %v1929, %v1937
          %v1942 = vadd.f32 %v1930, %v1938
          %1943 = vst [vmem:[%s1926] sm:$0xff] %v1939
          %1944 = vst [vmem:[%s1926 + $0x8] sm:$0xff] %v1940
          %1945 = vst [vmem:[%s1926 + $0x10] sm:$0xff] %v1941
          %1946 = vst [vmem:[%s1926 + $0x18] sm:$0xff] %v1942
        $region104: #{mlp_moe_forward.1} parent=75 // pred_fallthru
          _
        %p1947 = scmp.eq.s32.totalorder %s56, 3
        // Predicated region
        $region105: #{mlp_moe_forward.1} parent=75 // pred_check
          %p1948 = pneg %p1947
        $region106: #{mlp_moe_forward.1} parent=75 // pred_check_branch
          %1950 = sbr.rel (%p1948) target = $region108
        $region107: #{mlp_moe_forward.1} parent=75 // pred_region
          %s1951 = smul.u32 %s57, 4
          %s1952 = smul.addr %s1951, 8
          %s1953 = scalar_lea.vmem [#allocation5], %s1952
          %v1954 = vld [vmem:[%s1953] sm:$0xff]
          %v1955 = vld [vmem:[%s1953 + $0x8] sm:$0xff]
          %v1956 = vld [vmem:[%s1953 + $0x10] sm:$0xff]
          %v1957 = vld [vmem:[%s1953 + $0x18] sm:$0xff]
          %s1958 = smul.addr %s1951, 8
          %s1959 = scalar_lea.vmem %s612, %s1958 [#allocation16]
          %1960 = vst [vmem:[%s1959] sm:$0xff] %v1954
          %1961 = vst [vmem:[%s1959 + $0x8] sm:$0xff] %v1955
          %1962 = vst [vmem:[%s1959 + $0x10] sm:$0xff] %v1956
          %1963 = vst [vmem:[%s1959 + $0x18] sm:$0xff] %v1957
        $region108: #{mlp_moe_forward.1} parent=75 // pred_fallthru
          _
        %s1964 = sand.u32 %s381, 1
        %s1965 = scalar_lea.sflag [#allocation12], %s1964
        %s1966 = sand.u32 %s381, 1
        %s1967 = smul.addr %s1966, 32
        %s1968 = scalar_lea.vmem [#allocation16], %s1967
        %s1969 = smul.u32 2, %s55
        %p1970 = scmp.lt.s32.totalorder %s1969, 3
        %s1971 = scalar_select %p1970, %s1969, 3
        %s1972 = smul.addr %s1971, 2
        %s1973 = smul.addr %s1972, 8
        %s1974 = scalar_lea.vmem %s18, %s1973
        %s1975 = smul.u32 2, %s55
        %p1976 = scmp.lt.s32.totalorder %s1975, 3
        %s1977 = scalar_select %p1976, %s1975, 3
        %s1978 = smul.addr %s1977, 2
        %s1979 = smul.addr %s1978, 8
        %s1980 = scalar_lea.vmem %s19, %s1979
        // Predicated region
        $region109: #{mlp_moe_forward.1} parent=75 // pred_check
          %p1981 = pneg %p391
        $region110: #{mlp_moe_forward.1} parent=75 // pred_check_branch
          %1983 = sbr.rel (%p1981) target = $region112
        $region111: #{mlp_moe_forward.1} parent=75 // pred_region
          %s1984 = smul.u32 2, %s55
          %s1986 = ssub.s32 512, 512
          %1987 = vsyncadd %s1965, %s1986
          %s1988 = smul.addr %s1984, 2
          %s1989 = smul.addr %s1988, 128
          %s1990 = scalar_lea.hbm %s17, %s1989
          %s1991 = sshll.u32 %s1968, 4
          %s1992 = int_to_ptr.vmem [resolvable:$true] %s1991
          %1997 = dma.vmem_to_hbm [thread:$0]  %s1992, 512, %s1990, %s1965, 256, 256, 16
        $region112: #{mlp_moe_forward.1} parent=75 // pred_fallthru
          _
        // Predicated region
        $region113: #{mlp_moe_forward.1} parent=75 // pred_check
          %p1998 = pneg %p417
        $region114: #{mlp_moe_forward.1} parent=75 // pred_check_branch
          %2000 = sbr.rel (%p1998) target = $region116
        $region115: #{mlp_moe_forward.1} parent=75 // pred_region
          %s2001 = smul.u32 2, %s55
        $region116: #{mlp_moe_forward.1} parent=75 // pred_fallthru
          _
        // Predicated region
        $region117: #{mlp_moe_forward.1} parent=75 // pred_check
          %p2002 = pneg %p443
        $region118: #{mlp_moe_forward.1} parent=75 // pred_check_branch
          %2004 = sbr.rel (%p2002) target = $region120
        $region119: #{mlp_moe_forward.1} parent=75 // pred_region
          %s2005 = smul.u32 2, %s55
        $region120: #{mlp_moe_forward.1} parent=75 // pred_fallthru
          _
      $region76: #{mlp_moe_forward.1} parent=5 // pred_fallthru
        _
      %p2006 = scmp.le.s32.totalorder 2, %s45
      // Predicated region
      $region121: #{mlp_moe_forward.1} parent=5 // pred_check
        %p2007 = pneg %p2006
      $region122: #{mlp_moe_forward.1} parent=5 // pred_check_branch
        %2009 = sbr.rel (%p2007) target = $region124
      $region123: #{mlp_moe_forward.1} parent=5 // pred_region
        %s2010 = ssub.s32 %s45, 2
        // Predicated region
        $region125: #{mlp_moe_forward.1} parent=123 // pred_check
          %p2011 = pneg %p397
        $region126: #{mlp_moe_forward.1} parent=123 // pred_check_branch
          %2013 = sbr.rel (%p2011) target = $region128
        $region127: #{mlp_moe_forward.1} parent=123 // pred_region
          %s2014 = sand.u32 %s382, 1
          %s2015 = scalar_lea.sflag [#allocation12], %s2014
          %s2016 = sand.u32 %s382, 1
          %s2017 = smul.addr %s2016, 32
          %s2018 = scalar_lea.vmem [#allocation16], %s2017
          %2019 = dma.done %s2015, 512
        $region128: #{mlp_moe_forward.1} parent=123 // pred_fallthru
          _
        // Predicated region
        $region129: #{mlp_moe_forward.1} parent=123 // pred_check
          %p2020 = pneg %p423
        $region130: #{mlp_moe_forward.1} parent=123 // pred_check_branch
          %2022 = sbr.rel (%p2020) target = $region132
        $region131: #{mlp_moe_forward.1} parent=123 // pred_region
          %s2023 = smul.u32 2, %s58
          %p2024 = scmp.lt.s32.totalorder %s2023, 3
          %s2025 = scalar_select %p2024, %s2023, 3
          %s2026 = smul.addr %s2025, 2
          %s2027 = smul.addr %s2026, 8
          %s2028 = scalar_lea.vmem %s18, %s2027
        $region132: #{mlp_moe_forward.1} parent=123 // pred_fallthru
          _
        // Predicated region
        $region133: #{mlp_moe_forward.1} parent=123 // pred_check
          %p2029 = pneg %p449
        $region134: #{mlp_moe_forward.1} parent=123 // pred_check_branch
          %2031 = sbr.rel (%p2029) target = $region136
        $region135: #{mlp_moe_forward.1} parent=123 // pred_region
          %s2032 = smul.u32 2, %s58
          %p2033 = scmp.lt.s32.totalorder %s2032, 3
          %s2034 = scalar_select %p2033, %s2032, 3
          %s2035 = smul.addr %s2034, 2
          %s2036 = smul.addr %s2035, 8
          %s2037 = scalar_lea.vmem %s19, %s2036
        $region136: #{mlp_moe_forward.1} parent=123 // pred_fallthru
          _
      $region124: #{mlp_moe_forward.1} parent=5 // pred_fallthru
        _
    $region6: #{mlp_moe_forward.1} parent=1 // loop_footer
      %s49 = sadd.s32 1, %s45
    $region7: #{mlp_moe_forward.1} parent=1 // loop_footer_branch
      %44 = sbr.rel target = $region3
    $region8: #{mlp_moe_forward.1} parent=1 // loop_exit
      _
    %2038 = vsyncpa [#allocation11], 1
    %s2039 = scalar_lea.sflag [#allocation11], 1
    %2040 = vsyncpa %s2039, 1
    %2041 = vsyncpa [#allocation14], 1
    %2042 = vsyncpa [#allocation12], 1
    %s2043 = scalar_lea.sflag [#allocation12], 1
    %2044 = vsyncpa %s2043, 1

</llo_original>
